<compile_context>
chip_gen: v6e
topology: v6e:2x2x1
jax: 0.10.0
libtpu: 0.0.40
codegen_flags: <defaults>
</compile_context>

<pallas_src>
import functools

import jax
import jax.numpy as jnp
from jax import lax
from jax.experimental import pallas as pl
from jax.experimental.pallas import tpu as pltpu


# ----------------------------------------------------------------------------
# Pallas kernel: one block of `bblk` batch elements (token-major) per grid step.
# ----------------------------------------------------------------------------
def _self_attention_kernel(x_ref,      # (bblk*HW, C)  f32   token-major input
                           w_ref,      # (C, 2C)       bf16  [Wf^T Wg | Wh^T Wv^T]
                           b_ref,      # (1, 2C)       f32   [Wg^T bf | Wv bh]
                           bv_ref,     # (1, C)        f32
                           gamma_ref,  # (1, 1)        f32   (SMEM)
                           out_ref,    # (bblk*HW, C)  f32
                           pj_ref,     # (bblk*HW, 2C) bf16  VMEM scratch
                           *, bblk, hw, c):
    # --- fused f/g + h/v projections: ONE MXU pass over the whole token slab.
    # Concatenated weights -> 2C-wide (lane-dense, 256-wide on v6e/v7x) output;
    # bias add in f32, bf16 result parked in VMEM so nothing wide stays live.
    x_bf = x_ref[...].astype(jnp.bfloat16)            # transient; consumed by dot
    proj = jnp.dot(x_bf, w_ref[...], preferred_element_type=jnp.float32)
    pj_ref[...] = (proj + b_ref[...]).astype(jnp.bfloat16)

    gamma = gamma_ref[0, 0]
    gbv = gamma * bv_ref[...]                         # hoisted: gamma*bv once

    # Constant block-diagonal mask for pair-fused attention (built once).
    if bblk >= 2:
        ri = lax.broadcasted_iota(jnp.int32, (2 * hw, 2 * hw), 0)
        ci = lax.broadcasted_iota(jnp.int32, (2 * hw, 2 * hw), 1)
        pair_mask = jnp.where((ri >= hw) == (ci >= hw),
                              jnp.float32(0.0), jnp.float32(-1e30))

    # --- attention: two batch elements per lane-dense (2*HW, 2*HW) score block.
    for e0 in range(0, bblk, 2):                      # static, fully unrolled
        ne = min(2, bblk - e0)
        r0, rows = e0 * hw, ne * hw

        x_c = x_ref[pl.ds(r0, rows), :].astype(jnp.bfloat16)   # fresh load
        xa_c = pj_ref[pl.ds(r0, rows), pl.ds(0, c)]            # (rows, C) bf16
        hv_c = pj_ref[pl.ds(r0, rows), pl.ds(c, c)]            # (rows, C) bf16

        # Scores produced already transposed: st[i, j] = s[j, i]
        #   = (x_j A + kq) . x_i   (query j, key i).
        # The A@B^T (last x last) contraction is the MXU-native flash-attn form,
        # and the PV matmul below then contracts over beta's LAST axis.
        st = lax.dot_general(x_c, xa_c, (((1,), (1,)), ((), ())),
                             preferred_element_type=jnp.float32)  # (rows, rows)
        if ne == 2:
            st = st + pair_mask                        # kill cross-element terms

        # Softmax over the key axis == axis 0 of the transposed scores.
        m = jnp.max(st, axis=0, keepdims=True)
        p = jnp.exp(st - m)
        den = jnp.sum(p, axis=0, keepdims=True)
        r = pl.reciprocal(den, approx=True)            # EUP slot (nearly free)
        r = r * (2.0 - den * r)                        # one Newton step -> ~f32
        beta_t = (p * r).astype(jnp.bfloat16)          # == beta^T, (rows, rows)

        # o_v[i, ch] = sum_j beta[j, i] * hv[j, ch]   (bhv rides inside hv).
        o_v = lax.dot_general(beta_t, hv_c, (((1,), (0,)), ((), ())),
                              preferred_element_type=jnp.float32)  # (rows, C)

        # Residual: re-read x from VMEM (no long-lived f32 copy of the block).
        out_ref[pl.ds(r0, rows), :] = (
            x_ref[pl.ds(r0, rows), :] + gamma * o_v + gbv).astype(out_ref.dtype)


# ----------------------------------------------------------------------------
# Wrapper glue: spectral norm, weight fusion, grid choice, pallas_call.
# ----------------------------------------------------------------------------
def _spectral_normalize(w, u, eps=1e-12):
    """One power iteration, matching torch.nn.utils.spectral_norm (fwd)."""
    v = w.T @ u
    v = v / (jnp.linalg.norm(v) + eps)
    u = w @ v
    u = u / (jnp.linalg.norm(u) + eps)
    sigma = u @ (w @ v)
    return w / sigma
    # TODO(synk): PyTorch also updates `u` in place; persisting the power-
    # iteration vector is training-state plumbing, not a kernel concern.


def _num_tensorcores():
    try:
        kind = jax.devices()[0].device_kind.lower()
    except Exception:
        return 1
    return 2 if ("v7" in kind or "tpu7" in kind or "7x" in kind) else 1


def _default_block_batch(b):
    """Batch elements per grid step.  Single-TC chips (v5e/v6e): one grid step
    (saves per-step pipeline overhead, taller M for the projection matmul).
    v7x (2 TCs): >=2 grid steps so ("parallel",) puts one on each core."""
    bblk = b
    if _num_tensorcores() > 1 and b >= 2 and b % 2 == 0:
        bblk = b // 2
    while bblk > 8 and bblk % 2 == 0:   # mild cap on per-step slab for huge B
        bblk //= 2
    return bblk


def _self_attention_tokens(x_tok, w_cat, b_cat, bv, gamma, *, bblk, hw, c):
    """Token-major core: x_tok is (B*HW, C), channels on lanes."""
    n_tok = x_tok.shape[0]
    grid = (n_tok // (bblk * hw),)
    kernel = functools.partial(_self_attention_kernel, bblk=bblk, hw=hw, c=c)
    rep = lambda shape: pl.BlockSpec(shape, lambda i: (0, 0))
    return pl.pallas_call(
        kernel,
        out_shape=jax.ShapeDtypeStruct((n_tok, c), x_tok.dtype),
        grid=grid,
        in_specs=[
            pl.BlockSpec((bblk * hw, c), lambda i: (i, 0)),    # x tokens
            rep((c, 2 * c)),                                   # [A | Whv] bf16
            rep((1, 2 * c)),                                   # [kq | bhv]
            rep((1, c)),                                       # bv
            pl.BlockSpec((1, 1), lambda i: (0, 0),
                         memory_space=pltpu.SMEM),             # gamma
        ],
        out_specs=pl.BlockSpec((bblk * hw, c), lambda i: (i, 0)),
        scratch_shapes=[pltpu.VMEM((bblk * hw, 2 * c), jnp.bfloat16)],
        compiler_params=pltpu.CompilerParams(
            dimension_semantics=("parallel",)),
    )(x_tok, w_cat, b_cat, bv, gamma)


@functools.partial(jax.jit, static_argnames=("block_batch",))
def self_attention_forward(x_nchw, params, block_batch=None):
    b, c, h, w = x_nchw.shape
    hw = h * w
    bblk = block_batch if block_batch is not None else _default_block_batch(b)
    if b % bblk != 0:
        raise ValueError("batch must be divisible by block_batch")

    # Spectral normalization of the 1x1 conv weights (plain-JAX glue).
    wf = _spectral_normalize(params["wf"], params["uf"])   # (C//8, C)
    wg = _spectral_normalize(params["wg"], params["ug"])   # (C//8, C)
    wh = _spectral_normalize(params["wh"], params["uh"])   # (C//2, C)
    wv = _spectral_normalize(params["wv"], params["uv"])   # (C, C//2)

    # Fold the four 1x1 convs into ONE (C, 2C) matrix + ONE (1, 2C) bias row:
    #   A   = Wf^T Wg   kq  = Wg^T bf  (key-side bias; does NOT cancel in softmax)
    #   Whv = Wh^T Wv^T bhv = Wv bh
    # (the per-query bias x Wf^T bg and bf.bg are constant over keys -> dropped).
    a_mat = wf.T @ wg                                        # (C, C)
    whv = wh.T @ wv.T                                        # (C, C)
    w_cat = jnp.concatenate([a_mat, whv], axis=1).astype(jnp.bfloat16)  # (C, 2C)
    kq = params["bf"] @ wg
    bhv = params["bh"] @ wv.T
    b_cat = jnp.concatenate([kq, bhv]).reshape(1, 2 * c).astype(jnp.float32)
    bv = params["bv"].reshape(1, c).astype(jnp.float32)
    gamma = params["gamma"].reshape(1, 1).astype(jnp.float32)

    # NCHW -> (B*HW, C): tokens on sublanes, channels on lanes (lane-dense).
    # TODO(synk): inside the full Generator keep activations in this (B*HW, C)
    # layout across blocks and call _self_attention_tokens directly; the two
    # transposes below are un-hidden XLA ops that can rival the kernel's wall
    # time at this size and disappear entirely in that layout.
    x_tok = jnp.transpose(x_nchw.reshape(b, c, hw), (0, 2, 1)).reshape(b * hw, c)

    out_tok = _self_attention_tokens(x_tok, w_cat, b_cat, bv, gamma,
                                     bblk=bblk, hw=hw, c=c)

    # (B*HW, C) -> NCHW
    return jnp.transpose(out_tok.reshape(b, hw, c), (0, 2, 1)).reshape(b, c, h, w)


# ----------------------------------------------------------------------------
# References for self-check.
# ----------------------------------------------------------------------------
def _reference(x_nchw, wf, bf, wg, bg, wh, bh, wv, bv, gamma):
    """Exact f32 mirror of the PyTorch forward."""
    b, c, h, w = x_nchw.shape
    hw = h * w
    xf = x_nchw.reshape(b, c, hw)
    f = jnp.einsum("oc,bcp->bop", wf, xf) + bf[None, :, None]
    g = jnp.einsum("oc,bcp->bop", wg, xf) + bg[None, :, None]
    s = jnp.einsum("bkp,bkq->bpq", f, g)
    beta = jax.nn.softmax(s, axis=-1)
    h_ = jnp.einsum("oc,bcp->bop", wh, xf) + bh[None, :, None]
    o = jnp.einsum("bcj,bji->bci", h_, beta)
    o = jnp.einsum("oc,bci->boi", wv, o) + bv[None, :, None]
    return x_nchw + gamma * o.reshape(b, c, h, w)


def _fused_bf16_reference(x_nchw, a_mat, kq, whv, bhv, bv, gamma):
    """Pure-JAX mirror of the fused bf16 math done inside the kernel."""
    b, c, h, w = x_nchw.shape
    hw = h * w
    x = jnp.transpose(x_nchw.reshape(b, c, hw), (0, 2, 1))        # (b, hw, c) f32
    xb = x.astype(jnp.bfloat16)
    xa = (jnp.einsum("bpc,cd->bpd", xb, a_mat.astype(jnp.bfloat16),
                     preferred_element_type=jnp.float32) + kq).astype(jnp.bfloat16)
    hv = (jnp.einsum("bpc,cd->bpd", xb, whv.astype(jnp.bfloat16),
                     preferred_element_type=jnp.float32) + bhv).astype(jnp.bfloat16)
    s = jnp.einsum("bpc,bqc->bpq", xa, xb, preferred_element_type=jnp.float32)
    beta = jax.nn.softmax(s, axis=-1).astype(jnp.bfloat16)
    ov = jnp.einsum("bji,bjc->bic", beta, hv,
                    preferred_element_type=jnp.float32) + bv
    out = x + gamma * ov
    return jnp.transpose(out, (0, 2, 1)).reshape(b, c, h, w)


if __name__ == "__main__":
    # Shapes as the Generator actually uses this block:
    # SelfAttention(base_ch // 2 = 128) applied to a (B, 128, 8, 8) map.
    B, C, H, W = 4, 128, 8, 8

    key = jax.random.PRNGKey(0)
    ks = jax.random.split(key, 13)

    params = {
        # Conv2d 1x1 weights stored as (out_ch, in_ch); squeeze of (out, in, 1, 1).
        "wf": 0.1 * jax.random.normal(ks[0], (C // 8, C), jnp.float32),
        "wg": 0.1 * jax.random.normal(ks[1], (C // 8, C), jnp.float32),
        "wh": 0.1 * jax.random.normal(ks[2], (C // 2, C), jnp.float32),
        "wv": 0.1 * jax.random.normal(ks[3], (C, C // 2), jnp.float32),
        "bf": 0.05 * jax.random.normal(ks[4], (C // 8,), jnp.float32),
        "bg": 0.05 * jax.random.normal(ks[5], (C // 8,), jnp.float32),
        "bh": 0.05 * jax.random.normal(ks[6], (C // 2,), jnp.float32),
        "bv": 0.05 * jax.random.normal(ks[7], (C,), jnp.float32),
        # power-iteration vectors for spectral_norm (deterministic, normalized)
        "uf": jax.random.normal(ks[8], (C // 8,), jnp.float32),
        "ug": jax.random.normal(ks[9], (C // 8,), jnp.float32),
        "uh": jax.random.normal(ks[10], (C // 2,), jnp.float32),
        "uv": jax.random.normal(ks[11], (C,), jnp.float32),
        # Module __init__ sets gamma = 0 (output would trivially equal x);
        # use a deterministic non-zero value to exercise the full path.
        "gamma": jnp.array([0.7], jnp.float32),
    }
    for k in ("uf", "ug", "uh", "uv"):
        params[k] = params[k] / jnp.linalg.norm(params[k])

    x = jax.random.normal(ks[12], (B, C, H, W), jnp.float32)

    out = jax.block_until_ready(self_attention_forward(x, params))
    assert out.shape == (B, C, H, W)

    # ---- self-checks -------------------------------------------------------
    wf_n = _spectral_normalize(params["wf"], params["uf"])
    wg_n = _spectral_normalize(params["wg"], params["ug"])
    wh_n = _spectral_normalize(params["wh"], params["uh"])
    wv_n = _spectral_normalize(params["wv"], params["uv"])

    # (1) tight structural check against a pure-JAX mirror of the fused bf16
    #     math: catches fusion / masking / softmax-axis / indexing bugs.
    a_mat = wf_n.T @ wg_n
    kq = params["bf"] @ wg_n
    whv = wh_n.T @ wv_n.T
    bhv = params["bh"] @ wv_n.T
    ref_fused = _fused_bf16_reference(x, a_mat, kq, whv, bhv, params["bv"],
                                      params["gamma"][0])
    assert jnp.allclose(out, ref_fused, atol=2e-3, rtol=2e-3), \
        "mismatch vs fused bf16 reference"

    # (2) loose drift bound against the exact f32 PyTorch-equivalent forward
    #     (bf16 MXU operands => small numerical drift is expected/allowed).
    ref_exact = _reference(x, wf_n, params["bf"], wg_n, params["bg"],
                           wh_n, params["bh"], wv_n, params["bv"],
                           params["gamma"][0])
    assert jnp.allclose(out, ref_exact, atol=8e-2, rtol=2e-2), \
        "drift vs exact f32 reference larger than expected"

    # (3) exercise every grid layout: single-element fallback (bblk=1),
    #     one pair per step (bblk=2), and two pairs in one step (bblk=4).
    for bb in (1, 2, 4):
        out_bb = jax.block_until_ready(
            self_attention_forward(x, params, block_batch=bb))
        assert jnp.allclose(out_bb, ref_fused, atol=2e-3, rtol=2e-3), \
            f"mismatch vs fused bf16 reference at block_batch={bb}"

    print("KERNEL_OK")
</pallas_src>

<mosaic_0001>
module attributes {stable_mosaic.version = 11 : i64} {
  func.func @_self_attention_kernel(%arg0: i32, %arg1: memref<256x128xf32, #tpu.memory_space<vmem>>, %arg2: memref<128x256xbf16, #tpu.memory_space<vmem>>, %arg3: memref<1x256xf32, #tpu.memory_space<vmem>>, %arg4: memref<1x128xf32, #tpu.memory_space<vmem>>, %arg5: memref<1x1xf32, #tpu.memory_space<smem>>, %arg6: memref<256x128xf32, #tpu.memory_space<vmem>>, %arg7: memref<256x256xbf16, #tpu.memory_space<vmem>>) attributes {dimension_semantics = [#tpu.dimension_semantics<parallel>], iteration_bounds = array<i64: 1>, scalar_prefetch = 0 : i64, scratch_operands = 1 : i64, tpu.core_type = #tpu.core_type<tc>, window_params = [{transform_indices = @transform_0, window_bounds = array<i64: 256, 128>}, {pipeline_mode = #tpu.pipeline_mode<synchronous>, transform_indices = @transform_1, window_bounds = array<i64: 128, 256>}, {pipeline_mode = #tpu.pipeline_mode<synchronous>, transform_indices = @transform_2, window_bounds = array<i64: 1, 256>}, {pipeline_mode = #tpu.pipeline_mode<synchronous>, transform_indices = @transform_3, window_bounds = array<i64: 1, 128>}, {transform_indices = @transform_4, window_bounds = array<i64: 1, 1>}, {transform_indices = @transform_5, window_bounds = array<i64: 256, 128>}]} {
    %c0 = arith.constant 0 : index
    %c0_0 = arith.constant 0 : index
    %0 = vector.load %arg1[%c0, %c0_0] : memref<256x128xf32, #tpu.memory_space<vmem>>, vector<256x128xf32>
    %1 = arith.truncf %0 : vector<256x128xf32> to vector<256x128xbf16>
    %c0_1 = arith.constant 0 : index
    %c0_2 = arith.constant 0 : index
    %2 = vector.load %arg2[%c0_1, %c0_2] : memref<128x256xbf16, #tpu.memory_space<vmem>>, vector<128x256xbf16>
    %cst = arith.constant dense<0.000000e+00> : vector<256x256xf32>
    %3 = tpu.matmul %1, %2, %cst {dimension_numbers = #tpu.dot_dimension_numbers<[1], [0], [0], [1], [0, 0, 1, 1], [], []>} : vector<256x128xbf16>, vector<128x256xbf16>, vector<256x256xf32> -> vector<256x256xf32>
    %c0_3 = arith.constant 0 : index
    %c0_4 = arith.constant 0 : index
    %4 = vector.load %arg3[%c0_3, %c0_4] : memref<1x256xf32, #tpu.memory_space<vmem>>, vector<1x256xf32>
    %5 = vector.broadcast %4 : vector<1x256xf32> to vector<256x256xf32>
    %6 = arith.addf %3, %5 : vector<256x256xf32>
    %7 = arith.truncf %6 : vector<256x256xf32> to vector<256x256xbf16>
    %c0_5 = arith.constant 0 : index
    %c0_6 = arith.constant 0 : index
    %8 = vector.load %arg7[%c0_5, %c0_6] : memref<256x256xbf16, #tpu.memory_space<vmem>>, vector<256x256xbf16>
    tpu.vector_store %arg7[%c0_5, %c0_6], %7 {strides = array<i32>} : memref<256x256xbf16, #tpu.memory_space<vmem>>, vector<256x256xbf16>,
    %c0_7 = arith.constant 0 : index
    %c0_8 = arith.constant 0 : index
    %9 = memref.load %arg5[%c0_7, %c0_8] : memref<1x1xf32, #tpu.memory_space<smem>>
    %c0_9 = arith.constant 0 : index
    %c0_10 = arith.constant 0 : index
    %10 = vector.load %arg4[%c0_9, %c0_10] : memref<1x128xf32, #tpu.memory_space<vmem>>, vector<1x128xf32>
    %11 = vector.broadcast %9 : f32 to vector<1x128xf32>
    %12 = arith.mulf %11, %10 : vector<1x128xf32>
    %13 = tpu.iota {dimensions = array<i32: 0>} : vector<128x128xi32>
    %14 = tpu.iota {dimensions = array<i32: 1>} : vector<128x128xi32>
    %c64_i32 = arith.constant 64 : i32
    %15 = vector.broadcast %c64_i32 : i32 to vector<128x128xi32>
    %16 = arith.cmpi sge, %13, %15 : vector<128x128xi32>
    %c64_i32_11 = arith.constant 64 : i32
    %17 = vector.broadcast %c64_i32_11 : i32 to vector<128x128xi32>
    %18 = arith.cmpi sge, %14, %17 : vector<128x128xi32>
    %19 = arith.xori %16, %18 : vector<128x128xi1>
    %cst_12 = arith.constant dense<true> : vector<128x128xi1>
    %20 = arith.xori %19, %cst_12 : vector<128x128xi1>
    %cst_13 = arith.constant 0.000000e+00 : f32
    %cst_14 = arith.constant -1.000000e+30 : f32
    %21 = vector.broadcast %cst_13 : f32 to vector<128x128xf32>
    %22 = vector.broadcast %cst_14 : f32 to vector<128x128xf32>
    %23 = arith.select %20, %21, %22 : vector<128x128xi1>, vector<128x128xf32>
    %c0_15 = arith.constant 0 : index
    %c0_16 = arith.constant 0 : index
    %24 = vector.load %arg1[%c0_15, %c0_16] : memref<256x128xf32, #tpu.memory_space<vmem>>, vector<128x128xf32>
    %25 = arith.truncf %24 : vector<128x128xf32> to vector<128x128xbf16>
    %c0_17 = arith.constant 0 : index
    %c0_18 = arith.constant 0 : index
    %26 = vector.load %arg7[%c0_17, %c0_18] : memref<256x256xbf16, #tpu.memory_space<vmem>>, vector<128x128xbf16>
    %c0_19 = arith.constant 0 : index
    %c128 = arith.constant 128 : index
    %27 = vector.load %arg7[%c0_19, %c128] : memref<256x256xbf16, #tpu.memory_space<vmem>>, vector<128x128xbf16>
    %cst_20 = arith.constant dense<0.000000e+00> : vector<128x128xf32>
    %28 = tpu.matmul %25, %26, %cst_20 {dimension_numbers = #tpu.dot_dimension_numbers<[1], [1], [0], [0], [0, 0, 1, 0], [], []>} : vector<128x128xbf16>, vector<128x128xbf16>, vector<128x128xf32> -> vector<128x128xf32>
    %29 = arith.addf %28, %23 : vector<128x128xf32>
    %cst_21 = arith.constant dense<0xFF800000> : vector<128xf32>
    %30 = vector.multi_reduction <maximumf>, %29, %cst_21 [0] : vector<128x128xf32> to vector<128xf32>
    %31 = vector.shape_cast %30 : vector<128xf32> to vector<1x128xf32>
    %32 = vector.broadcast %31 : vector<1x128xf32> to vector<128x128xf32>
    %33 = arith.subf %29, %32 : vector<128x128xf32>
    %34 = math.exp %33 : vector<128x128xf32>
    %cst_22 = arith.constant dense<0.000000e+00> : vector<128xf32>
    %35 = vector.multi_reduction <add>, %34, %cst_22 [0] : vector<128x128xf32> to vector<128xf32>
    %36 = vector.shape_cast %35 : vector<128xf32> to vector<1x128xf32>
    %37 = tpu.reciprocal %36 {approx = true} : vector<1x128xf32> -> vector<1x128xf32>
    %38 = arith.mulf %36, %37 : vector<1x128xf32>
    %cst_23 = arith.constant 2.000000e+00 : f32
    %39 = vector.broadcast %cst_23 : f32 to vector<1x128xf32>
    %40 = arith.subf %39, %38 : vector<1x128xf32>
    %41 = arith.mulf %37, %40 : vector<1x128xf32>
    %42 = vector.broadcast %41 : vector<1x128xf32> to vector<128x128xf32>
    %43 = arith.mulf %34, %42 : vector<128x128xf32>
    %44 = arith.truncf %43 : vector<128x128xf32> to vector<128x128xbf16>
    %cst_24 = arith.constant dense<0.000000e+00> : vector<128x128xf32>
    %45 = tpu.matmul %44, %27, %cst_24 {dimension_numbers = #tpu.dot_dimension_numbers<[1], [0], [0], [1], [0, 0, 1, 1], [], []>} : vector<128x128xbf16>, vector<128x128xbf16>, vector<128x128xf32> -> vector<128x128xf32>
    %c0_25 = arith.constant 0 : index
    %c0_26 = arith.constant 0 : index
    %46 = vector.load %arg1[%c0_25, %c0_26] : memref<256x128xf32, #tpu.memory_space<vmem>>, vector<128x128xf32>
    %47 = vector.broadcast %9 : f32 to vector<128x128xf32>
    %48 = arith.mulf %47, %45 : vector<128x128xf32>
    %49 = arith.addf %46, %48 : vector<128x128xf32>
    %50 = vector.broadcast %12 : vector<1x128xf32> to vector<128x128xf32>
    %51 = arith.addf %49, %50 : vector<128x128xf32>
    %c0_27 = arith.constant 0 : index
    %c0_28 = arith.constant 0 : index
    %52 = vector.load %arg6[%c0_27, %c0_28] : memref<256x128xf32, #tpu.memory_space<vmem>>, vector<128x128xf32>
    tpu.vector_store %arg6[%c0_27, %c0_28], %51 {strides = array<i32>} : memref<256x128xf32, #tpu.memory_space<vmem>>, vector<128x128xf32>,
    %c128_29 = arith.constant 128 : index
    %c0_30 = arith.constant 0 : index
    %53 = vector.load %arg1[%c128_29, %c0_30] : memref<256x128xf32, #tpu.memory_space<vmem>>, vector<128x128xf32>
    %54 = arith.truncf %53 : vector<128x128xf32> to vector<128x128xbf16>
    %c128_31 = arith.constant 128 : index
    %c0_32 = arith.constant 0 : index
    %55 = vector.load %arg7[%c128_31, %c0_32] : memref<256x256xbf16, #tpu.memory_space<vmem>>, vector<128x128xbf16>
    %c128_33 = arith.constant 128 : index
    %c128_34 = arith.constant 128 : index
    %56 = vector.load %arg7[%c128_33, %c128_34] : memref<256x256xbf16, #tpu.memory_space<vmem>>, vector<128x128xbf16>
    %cst_35 = arith.constant dense<0.000000e+00> : vector<128x128xf32>
    %57 = tpu.matmul %54, %55, %cst_35 {dimension_numbers = #tpu.dot_dimension_numbers<[1], [1], [0], [0], [0, 0, 1, 0], [], []>} : vector<128x128xbf16>, vector<128x128xbf16>, vector<128x128xf32> -> vector<128x128xf32>
    %58 = arith.addf %57, %23 : vector<128x128xf32>
    %cst_36 = arith.constant dense<0xFF800000> : vector<128xf32>
    %59 = vector.multi_reduction <maximumf>, %58, %cst_36 [0] : vector<128x128xf32> to vector<128xf32>
    %60 = vector.shape_cast %59 : vector<128xf32> to vector<1x128xf32>
    %61 = vector.broadcast %60 : vector<1x128xf32> to vector<128x128xf32>
    %62 = arith.subf %58, %61 : vector<128x128xf32>
    %63 = math.exp %62 : vector<128x128xf32>
    %cst_37 = arith.constant dense<0.000000e+00> : vector<128xf32>
    %64 = vector.multi_reduction <add>, %63, %cst_37 [0] : vector<128x128xf32> to vector<128xf32>
    %65 = vector.shape_cast %64 : vector<128xf32> to vector<1x128xf32>
    %66 = tpu.reciprocal %65 {approx = true} : vector<1x128xf32> -> vector<1x128xf32>
    %67 = arith.mulf %65, %66 : vector<1x128xf32>
    %cst_38 = arith.constant 2.000000e+00 : f32
    %68 = vector.broadcast %cst_38 : f32 to vector<1x128xf32>
    %69 = arith.subf %68, %67 : vector<1x128xf32>
    %70 = arith.mulf %66, %69 : vector<1x128xf32>
    %71 = vector.broadcast %70 : vector<1x128xf32> to vector<128x128xf32>
    %72 = arith.mulf %63, %71 : vector<128x128xf32>
    %73 = arith.truncf %72 : vector<128x128xf32> to vector<128x128xbf16>
    %cst_39 = arith.constant dense<0.000000e+00> : vector<128x128xf32>
    %74 = tpu.matmul %73, %56, %cst_39 {dimension_numbers = #tpu.dot_dimension_numbers<[1], [0], [0], [1], [0, 0, 1, 1], [], []>} : vector<128x128xbf16>, vector<128x128xbf16>, vector<128x128xf32> -> vector<128x128xf32>
    %c128_40 = arith.constant 128 : index
    %c0_41 = arith.constant 0 : index
    %75 = vector.load %arg1[%c128_40, %c0_41] : memref<256x128xf32, #tpu.memory_space<vmem>>, vector<128x128xf32>
    %76 = vector.broadcast %9 : f32 to vector<128x128xf32>
    %77 = arith.mulf %76, %74 : vector<128x128xf32>
    %78 = arith.addf %75, %77 : vector<128x128xf32>
    %79 = vector.broadcast %12 : vector<1x128xf32> to vector<128x128xf32>
    %80 = arith.addf %78, %79 : vector<128x128xf32>
    %c128_42 = arith.constant 128 : index
    %c0_43 = arith.constant 0 : index
    %81 = vector.load %arg6[%c128_42, %c0_43] : memref<256x128xf32, #tpu.memory_space<vmem>>, vector<128x128xf32>
    tpu.vector_store %arg6[%c128_42, %c0_43], %80 {strides = array<i32>} : memref<256x128xf32, #tpu.memory_space<vmem>>, vector<128x128xf32>,
    return
  }
  func.func @transform_0(%arg0: i32) -> (i32, i32) {
    %c0_i32 = arith.constant 0 : i32
    %c0_i32_0 = arith.constant 0 : i32
    return %arg0, %c0_i32 : i32, i32
  }
  func.func @transform_1(%arg0: i32) -> (i32, i32) {
    %c0_i32 = arith.constant 0 : i32
    %c0_i32_0 = arith.constant 0 : i32
    %c0_i32_1 = arith.constant 0 : i32
    return %c0_i32, %c0_i32_0 : i32, i32
  }
  func.func @transform_2(%arg0: i32) -> (i32, i32) {
    %c0_i32 = arith.constant 0 : i32
    %c0_i32_0 = arith.constant 0 : i32
    %c0_i32_1 = arith.constant 0 : i32
    return %c0_i32, %c0_i32_0 : i32, i32
  }
  func.func @transform_3(%arg0: i32) -> (i32, i32) {
    %c0_i32 = arith.constant 0 : i32
    %c0_i32_0 = arith.constant 0 : i32
    %c0_i32_1 = arith.constant 0 : i32
    return %c0_i32, %c0_i32_0 : i32, i32
  }
  func.func @transform_4(%arg0: i32) -> (i32, i32) {
    %c0_i32 = arith.constant 0 : i32
    %c0_i32_0 = arith.constant 0 : i32
    %c0_i32_1 = arith.constant 0 : i32
    return %c0_i32, %c0_i32_0 : i32, i32
  }
  func.func @transform_5(%arg0: i32) -> (i32, i32) {
    %c0_i32 = arith.constant 0 : i32
    %c0_i32_0 = arith.constant 0 : i32
    return %arg0, %c0_i32 : i32, i32
  }
}

</mosaic_0001>

<llo_original>
// kernel: self_attention_forward.1
$region0: #{self_attention_forward.1}
  #allocation0 [shape = 'u32[]', space=smem, size = 0x4, offset = 0x4, fixed_abs, tag = 'smem constant byte address 0x4 - core index']
  #allocation1 [shape = 'u32[144,128]{1,0:T(1,128)}', space=vmem, size = 0x12000, scoped, tag = 'internal scratch']
  #allocation2 [shape = 'bf16[256,256]{1,0:T(8,128)(2,1)}', space=vmem, size = 0x20000, scoped, tag = 'scratch operand']
  #allocation3 [shape = 'f32[1,1]{1,0:T(1,128)S(6)}', space=smem, size = 0x200, scoped, tag = 'scoped memory for self_attention_forward.1']
  %s0 = inlined_call_operand.vmem [shape: f32[256,128], index: 0, kind: input, shape index: {}]
  %s1 = inlined_call_operand.vmem [shape: bf16[128,256], index: 1, kind: input, shape index: {}]
  %s2 = inlined_call_operand.vmem [shape: f32[1,256], index: 2, kind: input, shape index: {}]
  %s3 = inlined_call_operand.vmem [shape: f32[1,128], index: 3, kind: input, shape index: {}]
  %s4 = inlined_call_operand.<no memory space> [shape: f32[1,1], index: 4, kind: input, shape index: {}]
  %s5 = inlined_call_operand.hbm [shape: f32[256,128], index: 5, kind: output, shape index: {}]
  %s6 = sld [smem:[#allocation0]]
  $region30: #{self_attention_forward.1} parent=0
    _
  %s8 = ssub.s32 1, %s6
  %s9 = scalar_select 0, %s8, %s6
  %10 = sst [smem:[#allocation3]] %s4
  $region1: #{self_attention_forward.1} parent=0
    #allocation4 [shape = 'u8[131072]{0}', space=vmem, size = 0x20000, scoped, tag = 'output window, operand 0, single buffered']
    #allocation5 [shape = 's32[1]{0}', space=sflag, size = 0x4, scoped, tag = 'scoped memory for self_attention_forward.1']
    %11 = vsyncpa [#allocation5], 0
    // Predicated region
    $region2: #{self_attention_forward.1} parent=1 // pred_check
      _
    $region3: #{self_attention_forward.1} parent=1 // pred_check_branch
      %13 = sbr.rel (0) target = $region5
    $region4: #{self_attention_forward.1} parent=1 // pred_region
      _
    $region5: #{self_attention_forward.1} parent=1 // pred_fallthru
      _
    // Predicated region
    $region6: #{self_attention_forward.1} parent=1 // pred_check
      _
    $region7: #{self_attention_forward.1} parent=1 // pred_check_branch
      %15 = sbr.rel (0) target = $region9
    $region8: #{self_attention_forward.1} parent=1 // pred_region
      _
    $region9: #{self_attention_forward.1} parent=1 // pred_fallthru
      _
    // Predicated region
    $region10: #{self_attention_forward.1} parent=1 // pred_check
      _
    $region11: #{self_attention_forward.1} parent=1 // pred_check_branch
      %17 = sbr.rel (0) target = $region13
    $region12: #{self_attention_forward.1} parent=1 // pred_region
      _
    $region13: #{self_attention_forward.1} parent=1 // pred_fallthru
      _
    // Predicated region
    $region14: #{self_attention_forward.1} parent=1 // pred_check
      _
    $region15: #{self_attention_forward.1} parent=1 // pred_check_branch
      %19 = sbr.rel (0) target = $region17
    $region16: #{self_attention_forward.1} parent=1 // pred_region
      _
    $region17: #{self_attention_forward.1} parent=1 // pred_fallthru
      _
    // Predicated region
    $region18: #{self_attention_forward.1} parent=1 // pred_check
      _
    $region19: #{self_attention_forward.1} parent=1 // pred_check_branch
      %21 = sbr.rel (0) target = $region21
    $region20: #{self_attention_forward.1} parent=1 // pred_region
      _
    $region21: #{self_attention_forward.1} parent=1 // pred_fallthru
      _
    %v23 = vld [vmem:[%s0] sm:$0xff]
    %v24 = vld [vmem:[%s0 + $0x8] sm:$0xff]
    %v25 = vld [vmem:[%s0 + $0x10] sm:$0xff]
    %v26 = vld [vmem:[%s0 + $0x18] sm:$0xff]
    %v27 = vld [vmem:[%s0 + $0x20] sm:$0xff]
    %v28 = vld [vmem:[%s0 + $0x28] sm:$0xff]
    %v29 = vld [vmem:[%s0 + $0x30] sm:$0xff]
    %v30 = vld [vmem:[%s0 + $0x38] sm:$0xff]
    %v31 = vld [vmem:[%s0 + $0x40] sm:$0xff]
    %v32 = vld [vmem:[%s0 + $0x48] sm:$0xff]
    %v33 = vld [vmem:[%s0 + $0x50] sm:$0xff]
    %v34 = vld [vmem:[%s0 + $0x58] sm:$0xff]
    %v35 = vld [vmem:[%s0 + $0x60] sm:$0xff]
    %v36 = vld [vmem:[%s0 + $0x68] sm:$0xff]
    %v37 = vld [vmem:[%s0 + $0x70] sm:$0xff]
    %v38 = vld [vmem:[%s0 + $0x78] sm:$0xff]
    %v39 = vld [vmem:[%s0 + $0x80] sm:$0xff]
    %v40 = vld [vmem:[%s0 + $0x88] sm:$0xff]
    %v41 = vld [vmem:[%s0 + $0x90] sm:$0xff]
    %v42 = vld [vmem:[%s0 + $0x98] sm:$0xff]
    %v43 = vld [vmem:[%s0 + $0xa0] sm:$0xff]
    %v44 = vld [vmem:[%s0 + $0xa8] sm:$0xff]
    %v45 = vld [vmem:[%s0 + $0xb0] sm:$0xff]
    %v46 = vld [vmem:[%s0 + $0xb8] sm:$0xff]
    %v47 = vld [vmem:[%s0 + $0xc0] sm:$0xff]
    %v48 = vld [vmem:[%s0 + $0xc8] sm:$0xff]
    %v49 = vld [vmem:[%s0 + $0xd0] sm:$0xff]
    %v50 = vld [vmem:[%s0 + $0xd8] sm:$0xff]
    %v51 = vld [vmem:[%s0 + $0xe0] sm:$0xff]
    %v52 = vld [vmem:[%s0 + $0xe8] sm:$0xff]
    %v53 = vld [vmem:[%s0 + $0xf0] sm:$0xff]
    %v54 = vld [vmem:[%s0 + $0xf8] sm:$0xff]
    %v55 = vpack.c.bf16 %v24, %v23
    %v56 = vpack.c.bf16 %v26, %v25
    %v57 = vpack.c.bf16 %v28, %v27
    %v58 = vpack.c.bf16 %v30, %v29
    %v59 = vpack.c.bf16 %v32, %v31
    %v60 = vpack.c.bf16 %v34, %v33
    %v61 = vpack.c.bf16 %v36, %v35
    %v62 = vpack.c.bf16 %v38, %v37
    %v63 = vpack.c.bf16 %v40, %v39
    %v64 = vpack.c.bf16 %v42, %v41
    %v65 = vpack.c.bf16 %v44, %v43
    %v66 = vpack.c.bf16 %v46, %v45
    %v67 = vpack.c.bf16 %v48, %v47
    %v68 = vpack.c.bf16 %v50, %v49
    %v69 = vpack.c.bf16 %v52, %v51
    %v70 = vpack.c.bf16 %v54, %v53
    %v71 = vld [vmem:[%s1] sm:$0xff]
    %v72 = vld [vmem:[%s1 + $0x8] sm:$0xff]
    %v73 = vld [vmem:[%s1 + $0x10] sm:$0xff]
    %v74 = vld [vmem:[%s1 + $0x18] sm:$0xff]
    %v75 = vld [vmem:[%s1 + $0x20] sm:$0xff]
    %v76 = vld [vmem:[%s1 + $0x28] sm:$0xff]
    %v77 = vld [vmem:[%s1 + $0x30] sm:$0xff]
    %v78 = vld [vmem:[%s1 + $0x38] sm:$0xff]
    %v79 = vld [vmem:[%s1 + $0x40] sm:$0xff]
    %v80 = vld [vmem:[%s1 + $0x48] sm:$0xff]
    %v81 = vld [vmem:[%s1 + $0x50] sm:$0xff]
    %v82 = vld [vmem:[%s1 + $0x58] sm:$0xff]
    %v83 = vld [vmem:[%s1 + $0x60] sm:$0xff]
    %v84 = vld [vmem:[%s1 + $0x68] sm:$0xff]
    %v85 = vld [vmem:[%s1 + $0x70] sm:$0xff]
    %v86 = vld [vmem:[%s1 + $0x78] sm:$0xff]
    %v87 = vld [vmem:[%s2] sm:$0x3]
    %v89 = vlaneseq
    %v90 = vshrl.u32 %v89, 7
    %v91 = vsub.s32 0, %v90
    %v92 = vrot.slane %v87, %v91
    %v93 = vlaneseq
    %v94 = vshrl.u32 %v93, 7
    %v95 = vsub.s32 1, %v94
    %v96 = vrot.slane %v87, %v95
    %v115 = vunpack.c.l.b16 %v71
    %v116 = vunpack.c.h.b16 %v71
    %v117 = vunpack.c.l.b16 %v72
    %v118 = vunpack.c.h.b16 %v72
    %v119 = vunpack.c.l.b16 %v73
    %v120 = vunpack.c.h.b16 %v73
    %v121 = vunpack.c.l.b16 %v74
    %v122 = vunpack.c.h.b16 %v74
    %v123 = vunpack.c.l.b16 %v75
    %v124 = vunpack.c.h.b16 %v75
    %v125 = vunpack.c.l.b16 %v76
    %v126 = vunpack.c.h.b16 %v76
    %v127 = vunpack.c.l.b16 %v77
    %v128 = vunpack.c.h.b16 %v77
    %v129 = vunpack.c.l.b16 %v78
    %v130 = vunpack.c.h.b16 %v78
    %v131 = vunpack.c.l.b16 %v79
    %v132 = vunpack.c.h.b16 %v79
    %v133 = vunpack.c.l.b16 %v80
    %v134 = vunpack.c.h.b16 %v80
    %v135 = vunpack.c.l.b16 %v81
    %v136 = vunpack.c.h.b16 %v81
    %v137 = vunpack.c.l.b16 %v82
    %v138 = vunpack.c.h.b16 %v82
    %v139 = vunpack.c.l.b16 %v83
    %v140 = vunpack.c.h.b16 %v83
    %v141 = vunpack.c.l.b16 %v84
    %v142 = vunpack.c.h.b16 %v84
    %v143 = vunpack.c.l.b16 %v85
    %v144 = vunpack.c.h.b16 %v85
    %v145 = vunpack.c.l.b16 %v86
    %v146 = vunpack.c.h.b16 %v86
    %v147 = vpack.c.b16 %v117, %v115
    %v148 = vpack.c.b16 %v118, %v116
    %v149 = vpack.c.b16 %v121, %v119
    %v150 = vpack.c.b16 %v122, %v120
    %v151 = vpack.c.b16 %v125, %v123
    %v152 = vpack.c.b16 %v126, %v124
    %v153 = vpack.c.b16 %v129, %v127
    %v154 = vpack.c.b16 %v130, %v128
    %v155 = vpack.c.b16 %v133, %v131
    %v156 = vpack.c.b16 %v134, %v132
    %v157 = vpack.c.b16 %v137, %v135
    %v158 = vpack.c.b16 %v138, %v136
    %v159 = vpack.c.b16 %v141, %v139
    %v160 = vpack.c.b16 %v142, %v140
    %v161 = vpack.c.b16 %v145, %v143
    %v162 = vpack.c.b16 %v146, %v144
    %179 = vmatprep.subr.bf16.mxu0 %v162
    %180 = vmatpush1.bf16.msra.mxu0 %v161
    %181 = vmatprep.subr.bf16.mxu0 %v160
    %182 = vmatpush1.bf16.msra.mxu0 %v159
    %183 = vmatprep.subr.bf16.mxu0 %v158
    %184 = vmatpush1.bf16.msra.mxu0 %v157
    %185 = vmatprep.subr.bf16.mxu0 %v156
    %186 = vmatpush1.bf16.msra.mxu0 %v155
    %187 = vmatprep.subr.bf16.mxu0 %v154
    %188 = vmatpush1.bf16.msra.mxu0 %v153
    %189 = vmatprep.subr.bf16.mxu0 %v152
    %190 = vmatpush1.bf16.msra.mxu0 %v151
    %191 = vmatprep.subr.bf16.mxu0 %v150
    %192 = vmatpush1.bf16.msra.mxu0 %v149
    %193 = vmatprep.subr.bf16.mxu0 %v148
    %194 = vmatpush1.bf16.msra.mxu0 %v147
    %195 = vmatprep.subr.bf16.mxu0 0
    %196 = vmatpush2.bf16.msra.mxu0 0
    %197 = vmatprep.subr.bf16.mxu0 0
    %198 = vmatpush2.bf16.msra.mxu0 0
    %199 = vmatprep.subr.bf16.mxu0 0
    %200 = vmatpush2.bf16.msra.mxu0 0
    %201 = vmatprep.subr.bf16.mxu0 0
    %202 = vmatpush2.bf16.msra.mxu0 0
    %203 = vmatprep.subr.bf16.mxu0 0
    %204 = vmatpush2.bf16.msra.mxu0 0
    %205 = vmatprep.subr.bf16.mxu0 0
    %206 = vmatpush2.bf16.msra.mxu0 0
    %207 = vmatprep.subr.bf16.mxu0 0
    %208 = vmatpush2.bf16.msra.mxu0 0
    %209 = vmatprep.subr.bf16.mxu0 0
    %210 = vmatpush2.bf16.msra.mxu0 0
    %211 = vmatprep.mubr.bf16.mxu0 0
    %212 = vmatmul.mubr.bf16.gmra.mxu0 %v55
    %v213 = vpop.f32.mrf.mxu0
    %v214 = vadd.f32 %v92, %v213
    %v215 = vpop.f32.mrf.mxu0
    %v216 = vadd.f32 %v96, %v215
    %v217 = vpop.f32.mrf.mxu0
    %v218 = vadd.f32 %v92, %v217
    %v219 = vpop.f32.mrf.mxu0
    %v220 = vadd.f32 %v96, %v219
    %221 = vmatprep.mubr.bf16.mxu0 0
    %222 = vmatmul.mubr.bf16.gmra.mxu0 %v56
    %v223 = vpop.f32.mrf.mxu0
    %v224 = vadd.f32 %v92, %v223
    %v225 = vpop.f32.mrf.mxu0
    %v226 = vadd.f32 %v96, %v225
    %v227 = vpop.f32.mrf.mxu0
    %v228 = vadd.f32 %v92, %v227
    %v229 = vpop.f32.mrf.mxu0
    %v230 = vadd.f32 %v96, %v229
    %231 = vmatprep.mubr.bf16.mxu0 0
    %232 = vmatmul.mubr.bf16.gmra.mxu0 %v57
    %v233 = vpop.f32.mrf.mxu0
    %v234 = vadd.f32 %v92, %v233
    %v235 = vpop.f32.mrf.mxu0
    %v236 = vadd.f32 %v96, %v235
    %v237 = vpop.f32.mrf.mxu0
    %v238 = vadd.f32 %v92, %v237
    %v239 = vpop.f32.mrf.mxu0
    %v240 = vadd.f32 %v96, %v239
    %241 = vmatprep.mubr.bf16.mxu0 0
    %242 = vmatmul.mubr.bf16.gmra.mxu0 %v58
    %v243 = vpop.f32.mrf.mxu0
    %v244 = vadd.f32 %v92, %v243
    %v245 = vpop.f32.mrf.mxu0
    %v246 = vadd.f32 %v96, %v245
    %v247 = vpop.f32.mrf.mxu0
    %v248 = vadd.f32 %v92, %v247
    %v249 = vpop.f32.mrf.mxu0
    %v250 = vadd.f32 %v96, %v249
    %251 = vmatprep.mubr.bf16.mxu0 0
    %252 = vmatmul.mubr.bf16.gmra.mxu0 %v59
    %v253 = vpop.f32.mrf.mxu0
    %v254 = vadd.f32 %v92, %v253
    %v255 = vpop.f32.mrf.mxu0
    %v256 = vadd.f32 %v96, %v255
    %v257 = vpop.f32.mrf.mxu0
    %v258 = vadd.f32 %v92, %v257
    %v259 = vpop.f32.mrf.mxu0
    %v260 = vadd.f32 %v96, %v259
    %261 = vmatprep.mubr.bf16.mxu0 0
    %262 = vmatmul.mubr.bf16.gmra.mxu0 %v60
    %v263 = vpop.f32.mrf.mxu0
    %v264 = vadd.f32 %v92, %v263
    %v265 = vpop.f32.mrf.mxu0
    %v266 = vadd.f32 %v96, %v265
    %v267 = vpop.f32.mrf.mxu0
    %v268 = vadd.f32 %v92, %v267
    %v269 = vpop.f32.mrf.mxu0
    %v270 = vadd.f32 %v96, %v269
    %271 = vmatprep.mubr.bf16.mxu0 0
    %272 = vmatmul.mubr.bf16.gmra.mxu0 %v61
    %v273 = vpop.f32.mrf.mxu0
    %v274 = vadd.f32 %v92, %v273
    %v275 = vpop.f32.mrf.mxu0
    %v276 = vadd.f32 %v96, %v275
    %v277 = vpop.f32.mrf.mxu0
    %v278 = vadd.f32 %v92, %v277
    %v279 = vpop.f32.mrf.mxu0
    %v280 = vadd.f32 %v96, %v279
    %281 = vmatprep.mubr.bf16.mxu0 0
    %282 = vmatmul.mubr.bf16.gmra.mxu0 %v62
    %v283 = vpop.f32.mrf.mxu0
    %v284 = vadd.f32 %v92, %v283
    %v285 = vpop.f32.mrf.mxu0
    %v286 = vadd.f32 %v96, %v285
    %v287 = vpop.f32.mrf.mxu0
    %v288 = vadd.f32 %v92, %v287
    %v289 = vpop.f32.mrf.mxu0
    %v290 = vadd.f32 %v96, %v289
    %291 = vmatprep.mubr.bf16.mxu0 0
    %292 = vmatmul.mubr.bf16.gmra.mxu0 %v63
    %v293 = vpop.f32.mrf.mxu0
    %v294 = vadd.f32 %v92, %v293
    %v295 = vpop.f32.mrf.mxu0
    %v296 = vadd.f32 %v96, %v295
    %v297 = vpop.f32.mrf.mxu0
    %v298 = vadd.f32 %v92, %v297
    %v299 = vpop.f32.mrf.mxu0
    %v300 = vadd.f32 %v96, %v299
    %301 = vmatprep.mubr.bf16.mxu0 0
    %302 = vmatmul.mubr.bf16.gmra.mxu0 %v64
    %v303 = vpop.f32.mrf.mxu0
    %v304 = vadd.f32 %v92, %v303
    %v305 = vpop.f32.mrf.mxu0
    %v306 = vadd.f32 %v96, %v305
    %v307 = vpop.f32.mrf.mxu0
    %v308 = vadd.f32 %v92, %v307
    %v309 = vpop.f32.mrf.mxu0
    %v310 = vadd.f32 %v96, %v309
    %311 = vmatprep.mubr.bf16.mxu0 0
    %312 = vmatmul.mubr.bf16.gmra.mxu0 %v65
    %v313 = vpop.f32.mrf.mxu0
    %v314 = vadd.f32 %v92, %v313
    %v315 = vpop.f32.mrf.mxu0
    %v316 = vadd.f32 %v96, %v315
    %v317 = vpop.f32.mrf.mxu0
    %v318 = vadd.f32 %v92, %v317
    %v319 = vpop.f32.mrf.mxu0
    %v320 = vadd.f32 %v96, %v319
    %321 = vmatprep.mubr.bf16.mxu0 0
    %322 = vmatmul.mubr.bf16.gmra.mxu0 %v66
    %v323 = vpop.f32.mrf.mxu0
    %v324 = vadd.f32 %v92, %v323
    %v325 = vpop.f32.mrf.mxu0
    %v326 = vadd.f32 %v96, %v325
    %v327 = vpop.f32.mrf.mxu0
    %v328 = vadd.f32 %v92, %v327
    %v329 = vpop.f32.mrf.mxu0
    %v330 = vadd.f32 %v96, %v329
    %331 = vmatprep.mubr.bf16.mxu0 0
    %332 = vmatmul.mubr.bf16.gmra.mxu0 %v67
    %v333 = vpop.f32.mrf.mxu0
    %v334 = vadd.f32 %v92, %v333
    %v335 = vpop.f32.mrf.mxu0
    %v336 = vadd.f32 %v96, %v335
    %v337 = vpop.f32.mrf.mxu0
    %v338 = vadd.f32 %v92, %v337
    %v339 = vpop.f32.mrf.mxu0
    %v340 = vadd.f32 %v96, %v339
    %341 = vmatprep.mubr.bf16.mxu0 0
    %342 = vmatmul.mubr.bf16.gmra.mxu0 %v68
    %v343 = vpop.f32.mrf.mxu0
    %v344 = vadd.f32 %v92, %v343
    %v345 = vpop.f32.mrf.mxu0
    %v346 = vadd.f32 %v96, %v345
    %v347 = vpop.f32.mrf.mxu0
    %v348 = vadd.f32 %v92, %v347
    %v349 = vpop.f32.mrf.mxu0
    %v350 = vadd.f32 %v96, %v349
    %351 = vmatprep.mubr.bf16.mxu0 0
    %352 = vmatmul.mubr.bf16.gmra.mxu0 %v69
    %v353 = vpop.f32.mrf.mxu0
    %v354 = vadd.f32 %v92, %v353
    %v355 = vpop.f32.mrf.mxu0
    %v356 = vadd.f32 %v96, %v355
    %v357 = vpop.f32.mrf.mxu0
    %v358 = vadd.f32 %v92, %v357
    %v359 = vpop.f32.mrf.mxu0
    %v360 = vadd.f32 %v96, %v359
    %361 = vmatprep.mubr.bf16.mxu0 0
    %362 = vmatmul.mubr.bf16.gmra.mxu0 %v70
    %v363 = vpop.f32.mrf.mxu0
    %v364 = vadd.f32 %v92, %v363
    %v365 = vpop.f32.mrf.mxu0
    %v366 = vadd.f32 %v96, %v365
    %v367 = vpop.f32.mrf.mxu0
    %v368 = vadd.f32 %v92, %v367
    %v369 = vpop.f32.mrf.mxu0
    %v370 = vadd.f32 %v96, %v369
    %371 = vdwg.mxu0
    %v372 = vpack.c.bf16 %v218, %v214
    %v373 = vpack.c.bf16 %v220, %v216
    %v374 = vpack.c.bf16 %v228, %v224
    %v375 = vpack.c.bf16 %v230, %v226
    %v376 = vpack.c.bf16 %v238, %v234
    %v377 = vpack.c.bf16 %v240, %v236
    %v378 = vpack.c.bf16 %v248, %v244
    %v379 = vpack.c.bf16 %v250, %v246
    %v380 = vpack.c.bf16 %v258, %v254
    %v381 = vpack.c.bf16 %v260, %v256
    %v382 = vpack.c.bf16 %v268, %v264
    %v383 = vpack.c.bf16 %v270, %v266
    %v384 = vpack.c.bf16 %v278, %v274
    %v385 = vpack.c.bf16 %v280, %v276
    %v386 = vpack.c.bf16 %v288, %v284
    %v387 = vpack.c.bf16 %v290, %v286
    %v388 = vpack.c.bf16 %v298, %v294
    %v389 = vpack.c.bf16 %v300, %v296
    %v390 = vpack.c.bf16 %v308, %v304
    %v391 = vpack.c.bf16 %v310, %v306
    %v392 = vpack.c.bf16 %v318, %v314
    %v393 = vpack.c.bf16 %v320, %v316
    %v394 = vpack.c.bf16 %v328, %v324
    %v395 = vpack.c.bf16 %v330, %v326
    %v396 = vpack.c.bf16 %v338, %v334
    %v397 = vpack.c.bf16 %v340, %v336
    %v398 = vpack.c.bf16 %v348, %v344
    %v399 = vpack.c.bf16 %v350, %v346
    %v400 = vpack.c.bf16 %v358, %v354
    %v401 = vpack.c.bf16 %v360, %v356
    %v402 = vpack.c.bf16 %v368, %v364
    %v403 = vpack.c.bf16 %v370, %v366
    %v436 = vunpack.c.l.b16 %v372
    %v437 = vunpack.c.l.b16 %v373
    %v438 = vunpack.c.h.b16 %v372
    %v439 = vunpack.c.h.b16 %v373
    %v440 = vunpack.c.l.b16 %v374
    %v441 = vunpack.c.l.b16 %v375
    %v442 = vunpack.c.h.b16 %v374
    %v443 = vunpack.c.h.b16 %v375
    %v444 = vunpack.c.l.b16 %v376
    %v445 = vunpack.c.l.b16 %v377
    %v446 = vunpack.c.h.b16 %v376
    %v447 = vunpack.c.h.b16 %v377
    %v448 = vunpack.c.l.b16 %v378
    %v449 = vunpack.c.l.b16 %v379
    %v450 = vunpack.c.h.b16 %v378
    %v451 = vunpack.c.h.b16 %v379
    %v452 = vunpack.c.l.b16 %v380
    %v453 = vunpack.c.l.b16 %v381
    %v454 = vunpack.c.h.b16 %v380
    %v455 = vunpack.c.h.b16 %v381
    %v456 = vunpack.c.l.b16 %v382
    %v457 = vunpack.c.l.b16 %v383
    %v458 = vunpack.c.h.b16 %v382
    %v459 = vunpack.c.h.b16 %v383
    %v460 = vunpack.c.l.b16 %v384
    %v461 = vunpack.c.l.b16 %v385
    %v462 = vunpack.c.h.b16 %v384
    %v463 = vunpack.c.h.b16 %v385
    %v464 = vunpack.c.l.b16 %v386
    %v465 = vunpack.c.l.b16 %v387
    %v466 = vunpack.c.h.b16 %v386
    %v467 = vunpack.c.h.b16 %v387
    %v468 = vunpack.c.l.b16 %v388
    %v469 = vunpack.c.l.b16 %v389
    %v470 = vunpack.c.h.b16 %v388
    %v471 = vunpack.c.h.b16 %v389
    %v472 = vunpack.c.l.b16 %v390
    %v473 = vunpack.c.l.b16 %v391
    %v474 = vunpack.c.h.b16 %v390
    %v475 = vunpack.c.h.b16 %v391
    %v476 = vunpack.c.l.b16 %v392
    %v477 = vunpack.c.l.b16 %v393
    %v478 = vunpack.c.h.b16 %v392
    %v479 = vunpack.c.h.b16 %v393
    %v480 = vunpack.c.l.b16 %v394
    %v481 = vunpack.c.l.b16 %v395
    %v482 = vunpack.c.h.b16 %v394
    %v483 = vunpack.c.h.b16 %v395
    %v484 = vunpack.c.l.b16 %v396
    %v485 = vunpack.c.l.b16 %v397
    %v486 = vunpack.c.h.b16 %v396
    %v487 = vunpack.c.h.b16 %v397
    %v488 = vunpack.c.l.b16 %v398
    %v489 = vunpack.c.l.b16 %v399
    %v490 = vunpack.c.h.b16 %v398
    %v491 = vunpack.c.h.b16 %v399
    %v492 = vunpack.c.l.b16 %v400
    %v493 = vunpack.c.l.b16 %v401
    %v494 = vunpack.c.h.b16 %v400
    %v495 = vunpack.c.h.b16 %v401
    %v496 = vunpack.c.l.b16 %v402
    %v497 = vunpack.c.l.b16 %v403
    %v498 = vunpack.c.h.b16 %v402
    %v499 = vunpack.c.h.b16 %v403
    %v500 = vpack.c.b16 %v437, %v436
    %v501 = vpack.c.b16 %v439, %v438
    %v502 = vpack.c.b16 %v441, %v440
    %v503 = vpack.c.b16 %v443, %v442
    %v504 = vpack.c.b16 %v445, %v444
    %v505 = vpack.c.b16 %v447, %v446
    %v506 = vpack.c.b16 %v449, %v448
    %v507 = vpack.c.b16 %v451, %v450
    %v508 = vpack.c.b16 %v453, %v452
    %v509 = vpack.c.b16 %v455, %v454
    %v510 = vpack.c.b16 %v457, %v456
    %v511 = vpack.c.b16 %v459, %v458
    %v512 = vpack.c.b16 %v461, %v460
    %v513 = vpack.c.b16 %v463, %v462
    %v514 = vpack.c.b16 %v465, %v464
    %v515 = vpack.c.b16 %v467, %v466
    %v516 = vpack.c.b16 %v469, %v468
    %v517 = vpack.c.b16 %v471, %v470
    %v518 = vpack.c.b16 %v473, %v472
    %v519 = vpack.c.b16 %v475, %v474
    %v520 = vpack.c.b16 %v477, %v476
    %v521 = vpack.c.b16 %v479, %v478
    %v522 = vpack.c.b16 %v481, %v480
    %v523 = vpack.c.b16 %v483, %v482
    %v524 = vpack.c.b16 %v485, %v484
    %v525 = vpack.c.b16 %v487, %v486
    %v526 = vpack.c.b16 %v489, %v488
    %v527 = vpack.c.b16 %v491, %v490
    %v528 = vpack.c.b16 %v493, %v492
    %v529 = vpack.c.b16 %v495, %v494
    %v530 = vpack.c.b16 %v497, %v496
    %v531 = vpack.c.b16 %v499, %v498
    %564 = vst [vmem:[#allocation2] sm:$0xff] %v500
    %565 = vst [vmem:[#allocation2 + $0x8] sm:$0xff] %v501
    %566 = vst [vmem:[#allocation2 + $0x10] sm:$0xff] %v502
    %567 = vst [vmem:[#allocation2 + $0x18] sm:$0xff] %v503
    %568 = vst [vmem:[#allocation2 + $0x20] sm:$0xff] %v504
    %569 = vst [vmem:[#allocation2 + $0x28] sm:$0xff] %v505
    %570 = vst [vmem:[#allocation2 + $0x30] sm:$0xff] %v506
    %571 = vst [vmem:[#allocation2 + $0x38] sm:$0xff] %v507
    %572 = vst [vmem:[#allocation2 + $0x40] sm:$0xff] %v508
    %573 = vst [vmem:[#allocation2 + $0x48] sm:$0xff] %v509
    %574 = vst [vmem:[#allocation2 + $0x50] sm:$0xff] %v510
    %575 = vst [vmem:[#allocation2 + $0x58] sm:$0xff] %v511
    %576 = vst [vmem:[#allocation2 + $0x60] sm:$0xff] %v512
    %577 = vst [vmem:[#allocation2 + $0x68] sm:$0xff] %v513
    %578 = vst [vmem:[#allocation2 + $0x70] sm:$0xff] %v514
    %579 = vst [vmem:[#allocation2 + $0x78] sm:$0xff] %v515
    %580 = vst [vmem:[#allocation2 + $0x80] sm:$0xff] %v516
    %581 = vst [vmem:[#allocation2 + $0x88] sm:$0xff] %v517
    %582 = vst [vmem:[#allocation2 + $0x90] sm:$0xff] %v518
    %583 = vst [vmem:[#allocation2 + $0x98] sm:$0xff] %v519
    %584 = vst [vmem:[#allocation2 + $0xa0] sm:$0xff] %v520
    %585 = vst [vmem:[#allocation2 + $0xa8] sm:$0xff] %v521
    %586 = vst [vmem:[#allocation2 + $0xb0] sm:$0xff] %v522
    %587 = vst [vmem:[#allocation2 + $0xb8] sm:$0xff] %v523
    %588 = vst [vmem:[#allocation2 + $0xc0] sm:$0xff] %v524
    %589 = vst [vmem:[#allocation2 + $0xc8] sm:$0xff] %v525
    %590 = vst [vmem:[#allocation2 + $0xd0] sm:$0xff] %v526
    %591 = vst [vmem:[#allocation2 + $0xd8] sm:$0xff] %v527
    %592 = vst [vmem:[#allocation2 + $0xe0] sm:$0xff] %v528
    %593 = vst [vmem:[#allocation2 + $0xe8] sm:$0xff] %v529
    %594 = vst [vmem:[#allocation2 + $0xf0] sm:$0xff] %v530
    %595 = vst [vmem:[#allocation2 + $0xf8] sm:$0xff] %v531
    %s596 = sld [smem:[#allocation3]]
    %v597 = vld [vmem:[%s3] sm:$0x1]
    %v598 = vstv %s596
    %v599 = vmul.f32 %v598, %v597
    %v600 = vlaneseq
    %v601 = vshrl.u32 %v600, 7
    %v602 = vadd.s32 %v601, 8
    %v603 = vadd.s32 %v601, 16
    %v604 = vadd.s32 %v601, 24
    %v605 = vadd.s32 %v601, 32
    %v606 = vadd.s32 %v601, 40
    %v607 = vadd.s32 %v601, 48
    %v608 = vadd.s32 %v601, 56
    %v609 = vadd.s32 %v601, 64
    %v610 = vadd.s32 %v601, 72
    %v611 = vadd.s32 %v601, 80
    %v612 = vadd.s32 %v601, 88
    %v613 = vadd.s32 %v601, 96
    %v614 = vadd.s32 %v601, 104
    %v615 = vadd.s32 %v601, 112
    %v616 = vadd.s32 %v601, 120
    %v617 = vlaneseq
    %v618 = vand.u32 %v617, 127
    %vm619 = vcmp.ge.s32.totalorder %v601, 64
    %vm620 = vcmp.ge.s32.totalorder %v602, 64
    %vm621 = vcmp.ge.s32.totalorder %v603, 64
    %vm622 = vcmp.ge.s32.totalorder %v604, 64
    %vm623 = vcmp.ge.s32.totalorder %v605, 64
    %vm624 = vcmp.ge.s32.totalorder %v606, 64
    %vm625 = vcmp.ge.s32.totalorder %v607, 64
    %vm626 = vcmp.ge.s32.totalorder %v608, 64
    %vm627 = vcmp.ge.s32.totalorder %v609, 64
    %vm628 = vcmp.ge.s32.totalorder %v610, 64
    %vm629 = vcmp.ge.s32.totalorder %v611, 64
    %vm630 = vcmp.ge.s32.totalorder %v612, 64
    %vm631 = vcmp.ge.s32.totalorder %v613, 64
    %vm632 = vcmp.ge.s32.totalorder %v614, 64
    %vm633 = vcmp.ge.s32.totalorder %v615, 64
    %vm634 = vcmp.ge.s32.totalorder %v616, 64
    %vm635 = vcmp.ge.s32.totalorder %v618, 64
    %vm636 = vmxor %vm619, %vm635
    %vm637 = vmxor %vm620, %vm635
    %vm638 = vmxor %vm621, %vm635
    %vm639 = vmxor %vm622, %vm635
    %vm640 = vmxor %vm623, %vm635
    %vm641 = vmxor %vm624, %vm635
    %vm642 = vmxor %vm625, %vm635
    %vm643 = vmxor %vm626, %vm635
    %vm644 = vmxor %vm627, %vm635
    %vm645 = vmxor %vm628, %vm635
    %vm646 = vmxor %vm629, %vm635
    %vm647 = vmxor %vm630, %vm635
    %vm648 = vmxor %vm631, %vm635
    %vm649 = vmxor %vm632, %vm635
    %vm650 = vmxor %vm633, %vm635
    %vm651 = vmxor %vm634, %vm635
    %vm652 = vmxor %vm636, 1
    %vm653 = vmxor %vm637, 1
    %vm654 = vmxor %vm638, 1
    %vm655 = vmxor %vm639, 1
    %vm656 = vmxor %vm640, 1
    %vm657 = vmxor %vm641, 1
    %vm658 = vmxor %vm642, 1
    %vm659 = vmxor %vm643, 1
    %vm660 = vmxor %vm644, 1
    %vm661 = vmxor %vm645, 1
    %vm662 = vmxor %vm646, 1
    %vm663 = vmxor %vm647, 1
    %vm664 = vmxor %vm648, 1
    %vm665 = vmxor %vm649, 1
    %vm666 = vmxor %vm650, 1
    %vm667 = vmxor %vm651, 1
    %v668 = vsel %vm652, 0.0, -1e+30
    %v669 = vsel %vm653, 0.0, -1e+30
    %v670 = vsel %vm654, 0.0, -1e+30
    %v671 = vsel %vm655, 0.0, -1e+30
    %v672 = vsel %vm656, 0.0, -1e+30
    %v673 = vsel %vm657, 0.0, -1e+30
    %v674 = vsel %vm658, 0.0, -1e+30
    %v675 = vsel %vm659, 0.0, -1e+30
    %v676 = vsel %vm660, 0.0, -1e+30
    %v677 = vsel %vm661, 0.0, -1e+30
    %v678 = vsel %vm662, 0.0, -1e+30
    %v679 = vsel %vm663, 0.0, -1e+30
    %v680 = vsel %vm664, 0.0, -1e+30
    %v681 = vsel %vm665, 0.0, -1e+30
    %v682 = vsel %vm666, 0.0, -1e+30
    %v683 = vsel %vm667, 0.0, -1e+30
    %v684 = vld [vmem:[%s0] sm:$0xff]
    %v685 = vld [vmem:[%s0 + $0x8] sm:$0xff]
    %v686 = vld [vmem:[%s0 + $0x10] sm:$0xff]
    %v687 = vld [vmem:[%s0 + $0x18] sm:$0xff]
    %v688 = vld [vmem:[%s0 + $0x20] sm:$0xff]
    %v689 = vld [vmem:[%s0 + $0x28] sm:$0xff]
    %v690 = vld [vmem:[%s0 + $0x30] sm:$0xff]
    %v691 = vld [vmem:[%s0 + $0x38] sm:$0xff]
    %v692 = vld [vmem:[%s0 + $0x40] sm:$0xff]
    %v693 = vld [vmem:[%s0 + $0x48] sm:$0xff]
    %v694 = vld [vmem:[%s0 + $0x50] sm:$0xff]
    %v695 = vld [vmem:[%s0 + $0x58] sm:$0xff]
    %v696 = vld [vmem:[%s0 + $0x60] sm:$0xff]
    %v697 = vld [vmem:[%s0 + $0x68] sm:$0xff]
    %v698 = vld [vmem:[%s0 + $0x70] sm:$0xff]
    %v699 = vld [vmem:[%s0 + $0x78] sm:$0xff]
    %v700 = vpack.c.bf16 %v685, %v684
    %v701 = vpack.c.bf16 %v687, %v686
    %v702 = vpack.c.bf16 %v689, %v688
    %v703 = vpack.c.bf16 %v691, %v690
    %v704 = vpack.c.bf16 %v693, %v692
    %v705 = vpack.c.bf16 %v695, %v694
    %v706 = vpack.c.bf16 %v697, %v696
    %v707 = vpack.c.bf16 %v699, %v698
    %v708 = vld [vmem:[#allocation2] sm:$0xf]
    %v709 = vld [vmem:[#allocation2 + $0x8] sm:$0xf]
    %v710 = vld [vmem:[#allocation2 + $0x10] sm:$0xf]
    %v711 = vld [vmem:[#allocation2 + $0x18] sm:$0xf]
    %v712 = vld [vmem:[#allocation2 + $0x20] sm:$0xf]
    %v713 = vld [vmem:[#allocation2 + $0x28] sm:$0xf]
    %v714 = vld [vmem:[#allocation2 + $0x30] sm:$0xf]
    %v715 = vld [vmem:[#allocation2 + $0x38] sm:$0xf]
    %v716 = vld [vmem:[#allocation2 + $0x40] sm:$0xf]
    %v717 = vld [vmem:[#allocation2 + $0x48] sm:$0xf]
    %v718 = vld [vmem:[#allocation2 + $0x50] sm:$0xf]
    %v719 = vld [vmem:[#allocation2 + $0x58] sm:$0xf]
    %v720 = vld [vmem:[#allocation2 + $0x60] sm:$0xf]
    %v721 = vld [vmem:[#allocation2 + $0x68] sm:$0xf]
    %v722 = vld [vmem:[#allocation2 + $0x70] sm:$0xf]
    %v723 = vld [vmem:[#allocation2 + $0x78] sm:$0xf]
    %v724 = vld [vmem:[#allocation2 + $0x4] sm:$0xf]
    %v725 = vld [vmem:[#allocation2 + $0xc] sm:$0xf]
    %v726 = vld [vmem:[#allocation2 + $0x14] sm:$0xf]
    %v727 = vld [vmem:[#allocation2 + $0x1c] sm:$0xf]
    %v728 = vld [vmem:[#allocation2 + $0x24] sm:$0xf]
    %v729 = vld [vmem:[#allocation2 + $0x2c] sm:$0xf]
    %v730 = vld [vmem:[#allocation2 + $0x34] sm:$0xf]
    %v731 = vld [vmem:[#allocation2 + $0x3c] sm:$0xf]
    %v732 = vld [vmem:[#allocation2 + $0x44] sm:$0xf]
    %v733 = vld [vmem:[#allocation2 + $0x4c] sm:$0xf]
    %v734 = vld [vmem:[#allocation2 + $0x54] sm:$0xf]
    %v735 = vld [vmem:[#allocation2 + $0x5c] sm:$0xf]
    %v736 = vld [vmem:[#allocation2 + $0x64] sm:$0xf]
    %v737 = vld [vmem:[#allocation2 + $0x6c] sm:$0xf]
    %v738 = vld [vmem:[#allocation2 + $0x74] sm:$0xf]
    %v739 = vld [vmem:[#allocation2 + $0x7c] sm:$0xf]
    %v756 = vunpack.c.l.b16 %v708
    %v757 = vunpack.c.l.b16 %v709
    %v758 = vunpack.c.l.b16 %v710
    %v759 = vunpack.c.l.b16 %v711
    %v760 = vunpack.c.l.b16 %v712
    %v761 = vunpack.c.l.b16 %v713
    %v762 = vunpack.c.l.b16 %v714
    %v763 = vunpack.c.l.b16 %v715
    %v764 = vunpack.c.l.b16 %v716
    %v765 = vunpack.c.l.b16 %v717
    %v766 = vunpack.c.l.b16 %v718
    %v767 = vunpack.c.l.b16 %v719
    %v768 = vunpack.c.l.b16 %v720
    %v769 = vunpack.c.l.b16 %v721
    %v770 = vunpack.c.l.b16 %v722
    %v771 = vunpack.c.l.b16 %v723
    %v772 = vpack.c.b16 %v757, %v756
    %v773 = vpack.c.b16 %v759, %v758
    %v774 = vpack.c.b16 %v761, %v760
    %v775 = vpack.c.b16 %v763, %v762
    %v776 = vpack.c.b16 %v765, %v764
    %v777 = vpack.c.b16 %v767, %v766
    %v778 = vpack.c.b16 %v769, %v768
    %v779 = vpack.c.b16 %v771, %v770
    %788 = vmatprep.subr.bf16.mxu0 0
    %789 = vmatpush1.bf16.xpose.msra.mxu0 %v779
    %790 = vmatprep.subr.bf16.mxu0 0
    %791 = vmatpush1.bf16.xpose.msra.mxu0 %v778
    %792 = vmatprep.subr.bf16.mxu0 0
    %793 = vmatpush1.bf16.xpose.msra.mxu0 %v777
    %794 = vmatprep.subr.bf16.mxu0 0
    %795 = vmatpush1.bf16.xpose.msra.mxu0 %v776
    %796 = vmatprep.subr.bf16.mxu0 0
    %797 = vmatpush1.bf16.xpose.msra.mxu0 %v775
    %798 = vmatprep.subr.bf16.mxu0 0
    %799 = vmatpush1.bf16.xpose.msra.mxu0 %v774
    %800 = vmatprep.subr.bf16.mxu0 0
    %801 = vmatpush1.bf16.xpose.msra.mxu0 %v773
    %802 = vmatprep.subr.bf16.mxu0 0
    %803 = vmatpush1.bf16.xpose.msra.mxu0 %v772
    %804 = vmatprep.subr.bf16.mxu0 0
    %805 = vmatpush2.bf16.xpose.msra.mxu0 0
    %806 = vmatprep.subr.bf16.mxu0 0
    %807 = vmatpush2.bf16.xpose.msra.mxu0 0
    %808 = vmatprep.subr.bf16.mxu0 0
    %809 = vmatpush2.bf16.xpose.msra.mxu0 0
    %810 = vmatprep.subr.bf16.mxu0 0
    %811 = vmatpush2.bf16.xpose.msra.mxu0 0
    %812 = vmatprep.subr.bf16.mxu0 0
    %813 = vmatpush2.bf16.xpose.msra.mxu0 0
    %814 = vmatprep.subr.bf16.mxu0 0
    %815 = vmatpush2.bf16.xpose.msra.mxu0 0
    %816 = vmatprep.subr.bf16.mxu0 0
    %817 = vmatpush2.bf16.xpose.msra.mxu0 0
    %818 = vmatprep.subr.bf16.mxu0 0
    %819 = vmatpush2.bf16.xpose.msra.mxu0 0
    %820 = vmatprep.mubr.bf16.mxu0 0
    %821 = vmatmul.mubr.bf16.gmra.mxu0 %v700
    %v822 = vpop.f32.mrf.mxu0
    %v823 = vadd.f32 %v668, %v822
    %v824 = vpop.f32.mrf.mxu0
    %v825 = vpop.f32.mrf.mxu0
    %v826 = vadd.f32 %v669, %v825
    %v827 = vpop.f32.mrf.mxu0
    %828 = vmatprep.mubr.bf16.mxu0 0
    %829 = vmatmul.mubr.bf16.gmra.mxu0 %v701
    %v830 = vpop.f32.mrf.mxu0
    %v831 = vadd.f32 %v670, %v830
    %v832 = vpop.f32.mrf.mxu0
    %v833 = vpop.f32.mrf.mxu0
    %v834 = vadd.f32 %v671, %v833
    %v835 = vpop.f32.mrf.mxu0
    %836 = vmatprep.mubr.bf16.mxu0 0
    %837 = vmatmul.mubr.bf16.gmra.mxu0 %v702
    %v838 = vpop.f32.mrf.mxu0
    %v839 = vadd.f32 %v672, %v838
    %v840 = vpop.f32.mrf.mxu0
    %v841 = vpop.f32.mrf.mxu0
    %v842 = vadd.f32 %v673, %v841
    %v843 = vpop.f32.mrf.mxu0
    %844 = vmatprep.mubr.bf16.mxu0 0
    %845 = vmatmul.mubr.bf16.gmra.mxu0 %v703
    %v846 = vpop.f32.mrf.mxu0
    %v847 = vadd.f32 %v674, %v846
    %v848 = vpop.f32.mrf.mxu0
    %v849 = vpop.f32.mrf.mxu0
    %v850 = vadd.f32 %v675, %v849
    %v851 = vpop.f32.mrf.mxu0
    %852 = vmatprep.mubr.bf16.mxu0 0
    %853 = vmatmul.mubr.bf16.gmra.mxu0 %v704
    %v854 = vpop.f32.mrf.mxu0
    %v855 = vadd.f32 %v676, %v854
    %v856 = vpop.f32.mrf.mxu0
    %v857 = vpop.f32.mrf.mxu0
    %v858 = vadd.f32 %v677, %v857
    %v859 = vpop.f32.mrf.mxu0
    %860 = vmatprep.mubr.bf16.mxu0 0
    %861 = vmatmul.mubr.bf16.gmra.mxu0 %v705
    %v862 = vpop.f32.mrf.mxu0
    %v863 = vadd.f32 %v678, %v862
    %v864 = vpop.f32.mrf.mxu0
    %v865 = vpop.f32.mrf.mxu0
    %v866 = vadd.f32 %v679, %v865
    %v867 = vpop.f32.mrf.mxu0
    %868 = vmatprep.mubr.bf16.mxu0 0
    %869 = vmatmul.mubr.bf16.gmra.mxu0 %v706
    %v870 = vpop.f32.mrf.mxu0
    %v871 = vadd.f32 %v680, %v870
    %v872 = vpop.f32.mrf.mxu0
    %v873 = vpop.f32.mrf.mxu0
    %v874 = vadd.f32 %v681, %v873
    %v875 = vpop.f32.mrf.mxu0
    %876 = vmatprep.mubr.bf16.mxu0 0
    %877 = vmatmul.mubr.bf16.gmra.mxu0 %v707
    %v878 = vpop.f32.mrf.mxu0
    %v879 = vadd.f32 %v682, %v878
    %v880 = vpop.f32.mrf.mxu0
    %v881 = vpop.f32.mrf.mxu0
    %v882 = vadd.f32 %v683, %v881
    %v883 = vpop.f32.mrf.mxu0
    %884 = vdwg.mxu0
    %v885 = vmax.f32 %v823, %v839
    %v886 = vmax.f32 %v826, %v842
    %v887 = vmax.f32 %v831, %v847
    %v888 = vmax.f32 %v834, %v850
    %v889 = vmax.f32 %v885, %v855
    %v890 = vmax.f32 %v886, %v858
    %v891 = vmax.f32 %v887, %v863
    %v892 = vmax.f32 %v888, %v866
    %v893 = vmax.f32 %v889, %v871
    %v894 = vmax.f32 %v890, %v874
    %v895 = vmax.f32 %v891, %v879
    %v896 = vmax.f32 %v892, %v882
    %v897 = vmax.f32 %v893, %v894
    %v898 = vmax.f32 %v895, %v896
    %v899 = vmax.f32 %v897, %v898
    %v900 = vrot.slane %v899, 4
    %v901 = vmax.f32 %v899, %v900
    %v902 = vrot.slane %v901, 2
    %v903 = vmax.f32 %v901, %v902
    %v904 = vrot.slane %v903, 1
    %v905 = vmax.f32 %v903, %v904
    %v906 = vsub.f32 %v823, %v905
    %v907 = vsub.f32 %v826, %v905
    %v908 = vsub.f32 %v831, %v905
    %v909 = vsub.f32 %v834, %v905
    %v910 = vsub.f32 %v839, %v905
    %v911 = vsub.f32 %v842, %v905
    %v912 = vsub.f32 %v847, %v905
    %v913 = vsub.f32 %v850, %v905
    %v914 = vsub.f32 %v855, %v905
    %v915 = vsub.f32 %v858, %v905
    %v916 = vsub.f32 %v863, %v905
    %v917 = vsub.f32 %v866, %v905
    %v918 = vsub.f32 %v871, %v905
    %v919 = vsub.f32 %v874, %v905
    %v920 = vsub.f32 %v879, %v905
    %v921 = vsub.f32 %v882, %v905
    %v922 = vmul.f32 %v906, 1.442695
    %v923 = vpow.pop %v922
    %v924 = vmul.f32 %v907, 1.442695
    %v925 = vpow.pop %v924
    %v926 = vmul.f32 %v908, 1.442695
    %v927 = vpow.pop %v926
    %v928 = vmul.f32 %v909, 1.442695
    %v929 = vpow.pop %v928
    %v930 = vmul.f32 %v910, 1.442695
    %v931 = vpow.pop %v930
    %v932 = vmul.f32 %v911, 1.442695
    %v933 = vpow.pop %v932
    %v934 = vmul.f32 %v912, 1.442695
    %v935 = vpow.pop %v934
    %v936 = vmul.f32 %v913, 1.442695
    %v937 = vpow.pop %v936
    %v938 = vmul.f32 %v914, 1.442695
    %v939 = vpow.pop %v938
    %v940 = vmul.f32 %v915, 1.442695
    %v941 = vpow.pop %v940
    %v942 = vmul.f32 %v916, 1.442695
    %v943 = vpow.pop %v942
    %v944 = vmul.f32 %v917, 1.442695
    %v945 = vpow.pop %v944
    %v946 = vmul.f32 %v918, 1.442695
    %v947 = vpow.pop %v946
    %v948 = vmul.f32 %v919, 1.442695
    %v949 = vpow.pop %v948
    %v950 = vmul.f32 %v920, 1.442695
    %v951 = vpow.pop %v950
    %v952 = vmul.f32 %v921, 1.442695
    %v953 = vpow.pop %v952
    %v954 = vadd.f32 %v923, %v925
    %v955 = vadd.f32 %v954, %v927
    %v956 = vadd.f32 %v955, %v929
    %v957 = vadd.f32 %v956, %v931
    %v958 = vadd.f32 %v957, %v933
    %v959 = vadd.f32 %v958, %v935
    %v960 = vadd.f32 %v959, %v937
    %v961 = vadd.f32 %v960, %v939
    %v962 = vadd.f32 %v961, %v941
    %v963 = vadd.f32 %v962, %v943
    %v964 = vadd.f32 %v963, %v945
    %v965 = vadd.f32 %v964, %v947
    %v966 = vadd.f32 %v965, %v949
    %v967 = vadd.f32 %v966, %v951
    %v968 = vadd.f32 %v967, %v953
    %v969 = vrot.slane %v968, 4
    %v970 = vadd.f32 %v968, %v969
    %v971 = vrot.slane %v970, 2
    %v972 = vadd.f32 %v970, %v971
    %v973 = vrot.slane %v972, 1
    %v974 = vadd.f32 %v972, %v973
    %v975 = vrcp.pop %v974
    %v976 = vmul.f32 %v974, %v975
    %v977 = vsub.f32 2.0, %v976
    %v978 = vmul.f32 %v975, %v977
    %v979 = vmul.f32 %v923, %v978
    %v980 = vmul.f32 %v925, %v978
    %v981 = vmul.f32 %v927, %v978
    %v982 = vmul.f32 %v929, %v978
    %v983 = vmul.f32 %v931, %v978
    %v984 = vmul.f32 %v933, %v978
    %v985 = vmul.f32 %v935, %v978
    %v986 = vmul.f32 %v937, %v978
    %v987 = vmul.f32 %v939, %v978
    %v988 = vmul.f32 %v941, %v978
    %v989 = vmul.f32 %v943, %v978
    %v990 = vmul.f32 %v945, %v978
    %v991 = vmul.f32 %v947, %v978
    %v992 = vmul.f32 %v949, %v978
    %v993 = vmul.f32 %v951, %v978
    %v994 = vmul.f32 %v953, %v978
    %v995 = vpack.c.bf16 %v980, %v979
    %v996 = vpack.c.bf16 %v982, %v981
    %v997 = vpack.c.bf16 %v984, %v983
    %v998 = vpack.c.bf16 %v986, %v985
    %v999 = vpack.c.bf16 %v988, %v987
    %v1000 = vpack.c.bf16 %v990, %v989
    %v1001 = vpack.c.bf16 %v992, %v991
    %v1002 = vpack.c.bf16 %v994, %v993
    %v1019 = vunpack.c.l.b16 %v724
    %v1020 = vunpack.c.l.b16 %v725
    %v1021 = vunpack.c.l.b16 %v726
    %v1022 = vunpack.c.l.b16 %v727
    %v1023 = vunpack.c.l.b16 %v728
    %v1024 = vunpack.c.l.b16 %v729
    %v1025 = vunpack.c.l.b16 %v730
    %v1026 = vunpack.c.l.b16 %v731
    %v1027 = vunpack.c.l.b16 %v732
    %v1028 = vunpack.c.l.b16 %v733
    %v1029 = vunpack.c.l.b16 %v734
    %v1030 = vunpack.c.l.b16 %v735
    %v1031 = vunpack.c.l.b16 %v736
    %v1032 = vunpack.c.l.b16 %v737
    %v1033 = vunpack.c.l.b16 %v738
    %v1034 = vunpack.c.l.b16 %v739
    %v1035 = vpack.c.b16 %v1020, %v1019
    %v1036 = vpack.c.b16 %v1022, %v1021
    %v1037 = vpack.c.b16 %v1024, %v1023
    %v1038 = vpack.c.b16 %v1026, %v1025
    %v1039 = vpack.c.b16 %v1028, %v1027
    %v1040 = vpack.c.b16 %v1030, %v1029
    %v1041 = vpack.c.b16 %v1032, %v1031
    %v1042 = vpack.c.b16 %v1034, %v1033
    %1051 = vmatprep.subr.bf16.mxu0 0
    %1052 = vmatpush1.bf16.msra.mxu0 %v1042
    %1053 = vmatprep.subr.bf16.mxu0 0
    %1054 = vmatpush1.bf16.msra.mxu0 %v1041
    %1055 = vmatprep.subr.bf16.mxu0 0
    %1056 = vmatpush1.bf16.msra.mxu0 %v1040
    %1057 = vmatprep.subr.bf16.mxu0 0
    %1058 = vmatpush1.bf16.msra.mxu0 %v1039
    %1059 = vmatprep.subr.bf16.mxu0 0
    %1060 = vmatpush1.bf16.msra.mxu0 %v1038
    %1061 = vmatprep.subr.bf16.mxu0 0
    %1062 = vmatpush1.bf16.msra.mxu0 %v1037
    %1063 = vmatprep.subr.bf16.mxu0 0
    %1064 = vmatpush1.bf16.msra.mxu0 %v1036
    %1065 = vmatprep.subr.bf16.mxu0 0
    %1066 = vmatpush1.bf16.msra.mxu0 %v1035
    %1067 = vmatprep.subr.bf16.mxu0 0
    %1068 = vmatpush2.bf16.msra.mxu0 0
    %1069 = vmatprep.subr.bf16.mxu0 0
    %1070 = vmatpush2.bf16.msra.mxu0 0
    %1071 = vmatprep.subr.bf16.mxu0 0
    %1072 = vmatpush2.bf16.msra.mxu0 0
    %1073 = vmatprep.subr.bf16.mxu0 0
    %1074 = vmatpush2.bf16.msra.mxu0 0
    %1075 = vmatprep.subr.bf16.mxu0 0
    %1076 = vmatpush2.bf16.msra.mxu0 0
    %1077 = vmatprep.subr.bf16.mxu0 0
    %1078 = vmatpush2.bf16.msra.mxu0 0
    %1079 = vmatprep.subr.bf16.mxu0 0
    %1080 = vmatpush2.bf16.msra.mxu0 0
    %1081 = vmatprep.subr.bf16.mxu0 0
    %1082 = vmatpush2.bf16.msra.mxu0 0
    %1083 = vmatprep.mubr.bf16.mxu0 0
    %1084 = vmatmul.mubr.bf16.gmra.mxu0 %v995
    %v1085 = vpop.f32.mrf.mxu0
    %v1086 = vadd.f32 0.0, %v1085
    %v1087 = vpop.f32.mrf.mxu0
    %v1088 = vpop.f32.mrf.mxu0
    %v1089 = vadd.f32 0.0, %v1088
    %v1090 = vpop.f32.mrf.mxu0
    %1091 = vmatprep.mubr.bf16.mxu0 0
    %1092 = vmatmul.mubr.bf16.gmra.mxu0 %v996
    %v1093 = vpop.f32.mrf.mxu0
    %v1094 = vadd.f32 0.0, %v1093
    %v1095 = vpop.f32.mrf.mxu0
    %v1096 = vpop.f32.mrf.mxu0
    %v1097 = vadd.f32 0.0, %v1096
    %v1098 = vpop.f32.mrf.mxu0
    %1099 = vmatprep.mubr.bf16.mxu0 0
    %1100 = vmatmul.mubr.bf16.gmra.mxu0 %v997
    %v1101 = vpop.f32.mrf.mxu0
    %v1102 = vadd.f32 0.0, %v1101
    %v1103 = vpop.f32.mrf.mxu0
    %v1104 = vpop.f32.mrf.mxu0
    %v1105 = vadd.f32 0.0, %v1104
    %v1106 = vpop.f32.mrf.mxu0
    %1107 = vmatprep.mubr.bf16.mxu0 0
    %1108 = vmatmul.mubr.bf16.gmra.mxu0 %v998
    %v1109 = vpop.f32.mrf.mxu0
    %v1110 = vadd.f32 0.0, %v1109
    %v1111 = vpop.f32.mrf.mxu0
    %v1112 = vpop.f32.mrf.mxu0
    %v1113 = vadd.f32 0.0, %v1112
    %v1114 = vpop.f32.mrf.mxu0
    %1115 = vmatprep.mubr.bf16.mxu0 0
    %1116 = vmatmul.mubr.bf16.gmra.mxu0 %v999
    %v1117 = vpop.f32.mrf.mxu0
    %v1118 = vadd.f32 0.0, %v1117
    %v1119 = vpop.f32.mrf.mxu0
    %v1120 = vpop.f32.mrf.mxu0
    %v1121 = vadd.f32 0.0, %v1120
    %v1122 = vpop.f32.mrf.mxu0
    %1123 = vmatprep.mubr.bf16.mxu0 0
    %1124 = vmatmul.mubr.bf16.gmra.mxu0 %v1000
    %v1125 = vpop.f32.mrf.mxu0
    %v1126 = vadd.f32 0.0, %v1125
    %v1127 = vpop.f32.mrf.mxu0
    %v1128 = vpop.f32.mrf.mxu0
    %v1129 = vadd.f32 0.0, %v1128
    %v1130 = vpop.f32.mrf.mxu0
    %1131 = vmatprep.mubr.bf16.mxu0 0
    %1132 = vmatmul.mubr.bf16.gmra.mxu0 %v1001
    %v1133 = vpop.f32.mrf.mxu0
    %v1134 = vadd.f32 0.0, %v1133
    %v1135 = vpop.f32.mrf.mxu0
    %v1136 = vpop.f32.mrf.mxu0
    %v1137 = vadd.f32 0.0, %v1136
    %v1138 = vpop.f32.mrf.mxu0
    %1139 = vmatprep.mubr.bf16.mxu0 0
    %1140 = vmatmul.mubr.bf16.gmra.mxu0 %v1002
    %v1141 = vpop.f32.mrf.mxu0
    %v1142 = vadd.f32 0.0, %v1141
    %v1143 = vpop.f32.mrf.mxu0
    %v1144 = vpop.f32.mrf.mxu0
    %v1145 = vadd.f32 0.0, %v1144
    %v1146 = vpop.f32.mrf.mxu0
    %1147 = vdwg.mxu0
    %v1148 = vmul.f32 %v598, %v1086
    %v1149 = vmul.f32 %v598, %v1089
    %v1150 = vmul.f32 %v598, %v1094
    %v1151 = vmul.f32 %v598, %v1097
    %v1152 = vmul.f32 %v598, %v1102
    %v1153 = vmul.f32 %v598, %v1105
    %v1154 = vmul.f32 %v598, %v1110
    %v1155 = vmul.f32 %v598, %v1113
    %v1156 = vmul.f32 %v598, %v1118
    %v1157 = vmul.f32 %v598, %v1121
    %v1158 = vmul.f32 %v598, %v1126
    %v1159 = vmul.f32 %v598, %v1129
    %v1160 = vmul.f32 %v598, %v1134
    %v1161 = vmul.f32 %v598, %v1137
    %v1162 = vmul.f32 %v598, %v1142
    %v1163 = vmul.f32 %v598, %v1145
    %v1164 = vadd.f32 %v684, %v1148
    %v1165 = vadd.f32 %v685, %v1149
    %v1166 = vadd.f32 %v686, %v1150
    %v1167 = vadd.f32 %v687, %v1151
    %v1168 = vadd.f32 %v688, %v1152
    %v1169 = vadd.f32 %v689, %v1153
    %v1170 = vadd.f32 %v690, %v1154
    %v1171 = vadd.f32 %v691, %v1155
    %v1172 = vadd.f32 %v692, %v1156
    %v1173 = vadd.f32 %v693, %v1157
    %v1174 = vadd.f32 %v694, %v1158
    %v1175 = vadd.f32 %v695, %v1159
    %v1176 = vadd.f32 %v696, %v1160
    %v1177 = vadd.f32 %v697, %v1161
    %v1178 = vadd.f32 %v698, %v1162
    %v1179 = vadd.f32 %v699, %v1163
    %v1181 = vlaneseq
    %v1182 = vshrl.u32 %v1181, 7
    %v1183 = vsub.s32 0, %v1182
    %v1184 = vrot.slane %v599, %v1183
    %v1186 = vadd.f32 %v1164, %v1184
    %v1187 = vadd.f32 %v1165, %v1184
    %v1188 = vadd.f32 %v1166, %v1184
    %v1189 = vadd.f32 %v1167, %v1184
    %v1190 = vadd.f32 %v1168, %v1184
    %v1191 = vadd.f32 %v1169, %v1184
    %v1192 = vadd.f32 %v1170, %v1184
    %v1193 = vadd.f32 %v1171, %v1184
    %v1194 = vadd.f32 %v1172, %v1184
    %v1195 = vadd.f32 %v1173, %v1184
    %v1196 = vadd.f32 %v1174, %v1184
    %v1197 = vadd.f32 %v1175, %v1184
    %v1198 = vadd.f32 %v1176, %v1184
    %v1199 = vadd.f32 %v1177, %v1184
    %v1200 = vadd.f32 %v1178, %v1184
    %v1201 = vadd.f32 %v1179, %v1184
    %1202 = vst [vmem:[#allocation4] sm:$0xff] %v1186
    %1203 = vst [vmem:[#allocation4 + $0x8] sm:$0xff] %v1187
    %1204 = vst [vmem:[#allocation4 + $0x10] sm:$0xff] %v1188
    %1205 = vst [vmem:[#allocation4 + $0x18] sm:$0xff] %v1189
    %1206 = vst [vmem:[#allocation4 + $0x20] sm:$0xff] %v1190
    %1207 = vst [vmem:[#allocation4 + $0x28] sm:$0xff] %v1191
    %1208 = vst [vmem:[#allocation4 + $0x30] sm:$0xff] %v1192
    %1209 = vst [vmem:[#allocation4 + $0x38] sm:$0xff] %v1193
    %1210 = vst [vmem:[#allocation4 + $0x40] sm:$0xff] %v1194
    %1211 = vst [vmem:[#allocation4 + $0x48] sm:$0xff] %v1195
    %1212 = vst [vmem:[#allocation4 + $0x50] sm:$0xff] %v1196
    %1213 = vst [vmem:[#allocation4 + $0x58] sm:$0xff] %v1197
    %1214 = vst [vmem:[#allocation4 + $0x60] sm:$0xff] %v1198
    %1215 = vst [vmem:[#allocation4 + $0x68] sm:$0xff] %v1199
    %1216 = vst [vmem:[#allocation4 + $0x70] sm:$0xff] %v1200
    %1217 = vst [vmem:[#allocation4 + $0x78] sm:$0xff] %v1201
    %v1218 = vld [vmem:[%s0 + $0x80] sm:$0xff]
    %v1219 = vld [vmem:[%s0 + $0x88] sm:$0xff]
    %v1220 = vld [vmem:[%s0 + $0x90] sm:$0xff]
    %v1221 = vld [vmem:[%s0 + $0x98] sm:$0xff]
    %v1222 = vld [vmem:[%s0 + $0xa0] sm:$0xff]
    %v1223 = vld [vmem:[%s0 + $0xa8] sm:$0xff]
    %v1224 = vld [vmem:[%s0 + $0xb0] sm:$0xff]
    %v1225 = vld [vmem:[%s0 + $0xb8] sm:$0xff]
    %v1226 = vld [vmem:[%s0 + $0xc0] sm:$0xff]
    %v1227 = vld [vmem:[%s0 + $0xc8] sm:$0xff]
    %v1228 = vld [vmem:[%s0 + $0xd0] sm:$0xff]
    %v1229 = vld [vmem:[%s0 + $0xd8] sm:$0xff]
    %v1230 = vld [vmem:[%s0 + $0xe0] sm:$0xff]
    %v1231 = vld [vmem:[%s0 + $0xe8] sm:$0xff]
    %v1232 = vld [vmem:[%s0 + $0xf0] sm:$0xff]
    %v1233 = vld [vmem:[%s0 + $0xf8] sm:$0xff]
    %v1234 = vpack.c.bf16 %v1219, %v1218
    %v1235 = vpack.c.bf16 %v1221, %v1220
    %v1236 = vpack.c.bf16 %v1223, %v1222
    %v1237 = vpack.c.bf16 %v1225, %v1224
    %v1238 = vpack.c.bf16 %v1227, %v1226
    %v1239 = vpack.c.bf16 %v1229, %v1228
    %v1240 = vpack.c.bf16 %v1231, %v1230
    %v1241 = vpack.c.bf16 %v1233, %v1232
    %v1242 = vld [vmem:[#allocation2 + $0x80] sm:$0xf]
    %v1243 = vld [vmem:[#allocation2 + $0x88] sm:$0xf]
    %v1244 = vld [vmem:[#allocation2 + $0x90] sm:$0xf]
    %v1245 = vld [vmem:[#allocation2 + $0x98] sm:$0xf]
    %v1246 = vld [vmem:[#allocation2 + $0xa0] sm:$0xf]
    %v1247 = vld [vmem:[#allocation2 + $0xa8] sm:$0xf]
    %v1248 = vld [vmem:[#allocation2 + $0xb0] sm:$0xf]
    %v1249 = vld [vmem:[#allocation2 + $0xb8] sm:$0xf]
    %v1250 = vld [vmem:[#allocation2 + $0xc0] sm:$0xf]
    %v1251 = vld [vmem:[#allocation2 + $0xc8] sm:$0xf]
    %v1252 = vld [vmem:[#allocation2 + $0xd0] sm:$0xf]
    %v1253 = vld [vmem:[#allocation2 + $0xd8] sm:$0xf]
    %v1254 = vld [vmem:[#allocation2 + $0xe0] sm:$0xf]
    %v1255 = vld [vmem:[#allocation2 + $0xe8] sm:$0xf]
    %v1256 = vld [vmem:[#allocation2 + $0xf0] sm:$0xf]
    %v1257 = vld [vmem:[#allocation2 + $0xf8] sm:$0xf]
    %v1258 = vld [vmem:[#allocation2 + $0x84] sm:$0xf]
    %v1259 = vld [vmem:[#allocation2 + $0x8c] sm:$0xf]
    %v1260 = vld [vmem:[#allocation2 + $0x94] sm:$0xf]
    %v1261 = vld [vmem:[#allocation2 + $0x9c] sm:$0xf]
    %v1262 = vld [vmem:[#allocation2 + $0xa4] sm:$0xf]
    %v1263 = vld [vmem:[#allocation2 + $0xac] sm:$0xf]
    %v1264 = vld [vmem:[#allocation2 + $0xb4] sm:$0xf]
    %v1265 = vld [vmem:[#allocation2 + $0xbc] sm:$0xf]
    %v1266 = vld [vmem:[#allocation2 + $0xc4] sm:$0xf]
    %v1267 = vld [vmem:[#allocation2 + $0xcc] sm:$0xf]
    %v1268 = vld [vmem:[#allocation2 + $0xd4] sm:$0xf]
    %v1269 = vld [vmem:[#allocation2 + $0xdc] sm:$0xf]
    %v1270 = vld [vmem:[#allocation2 + $0xe4] sm:$0xf]
    %v1271 = vld [vmem:[#allocation2 + $0xec] sm:$0xf]
    %v1272 = vld [vmem:[#allocation2 + $0xf4] sm:$0xf]
    %v1273 = vld [vmem:[#allocation2 + $0xfc] sm:$0xf]
    %v1290 = vunpack.c.l.b16 %v1242
    %v1291 = vunpack.c.l.b16 %v1243
    %v1292 = vunpack.c.l.b16 %v1244
    %v1293 = vunpack.c.l.b16 %v1245
    %v1294 = vunpack.c.l.b16 %v1246
    %v1295 = vunpack.c.l.b16 %v1247
    %v1296 = vunpack.c.l.b16 %v1248
    %v1297 = vunpack.c.l.b16 %v1249
    %v1298 = vunpack.c.l.b16 %v1250
    %v1299 = vunpack.c.l.b16 %v1251
    %v1300 = vunpack.c.l.b16 %v1252
    %v1301 = vunpack.c.l.b16 %v1253
    %v1302 = vunpack.c.l.b16 %v1254
    %v1303 = vunpack.c.l.b16 %v1255
    %v1304 = vunpack.c.l.b16 %v1256
    %v1305 = vunpack.c.l.b16 %v1257
    %v1306 = vpack.c.b16 %v1291, %v1290
    %v1307 = vpack.c.b16 %v1293, %v1292
    %v1308 = vpack.c.b16 %v1295, %v1294
    %v1309 = vpack.c.b16 %v1297, %v1296
    %v1310 = vpack.c.b16 %v1299, %v1298
    %v1311 = vpack.c.b16 %v1301, %v1300
    %v1312 = vpack.c.b16 %v1303, %v1302
    %v1313 = vpack.c.b16 %v1305, %v1304
    %1322 = vmatprep.subr.bf16.mxu0 0
    %1323 = vmatpush1.bf16.xpose.msra.mxu0 %v1313
    %1324 = vmatprep.subr.bf16.mxu0 0
    %1325 = vmatpush1.bf16.xpose.msra.mxu0 %v1312
    %1326 = vmatprep.subr.bf16.mxu0 0
    %1327 = vmatpush1.bf16.xpose.msra.mxu0 %v1311
    %1328 = vmatprep.subr.bf16.mxu0 0
    %1329 = vmatpush1.bf16.xpose.msra.mxu0 %v1310
    %1330 = vmatprep.subr.bf16.mxu0 0
    %1331 = vmatpush1.bf16.xpose.msra.mxu0 %v1309
    %1332 = vmatprep.subr.bf16.mxu0 0
    %1333 = vmatpush1.bf16.xpose.msra.mxu0 %v1308
    %1334 = vmatprep.subr.bf16.mxu0 0
    %1335 = vmatpush1.bf16.xpose.msra.mxu0 %v1307
    %1336 = vmatprep.subr.bf16.mxu0 0
    %1337 = vmatpush1.bf16.xpose.msra.mxu0 %v1306
    %1338 = vmatprep.subr.bf16.mxu0 0
    %1339 = vmatpush2.bf16.xpose.msra.mxu0 0
    %1340 = vmatprep.subr.bf16.mxu0 0
    %1341 = vmatpush2.bf16.xpose.msra.mxu0 0
    %1342 = vmatprep.subr.bf16.mxu0 0
    %1343 = vmatpush2.bf16.xpose.msra.mxu0 0
    %1344 = vmatprep.subr.bf16.mxu0 0
    %1345 = vmatpush2.bf16.xpose.msra.mxu0 0
    %1346 = vmatprep.subr.bf16.mxu0 0
    %1347 = vmatpush2.bf16.xpose.msra.mxu0 0
    %1348 = vmatprep.subr.bf16.mxu0 0
    %1349 = vmatpush2.bf16.xpose.msra.mxu0 0
    %1350 = vmatprep.subr.bf16.mxu0 0
    %1351 = vmatpush2.bf16.xpose.msra.mxu0 0
    %1352 = vmatprep.subr.bf16.mxu0 0
    %1353 = vmatpush2.bf16.xpose.msra.mxu0 0
    %1354 = vmatprep.mubr.bf16.mxu0 0
    %1355 = vmatmul.mubr.bf16.gmra.mxu0 %v1234
    %v1356 = vpop.f32.mrf.mxu0
    %v1357 = vadd.f32 %v668, %v1356
    %v1358 = vpop.f32.mrf.mxu0
    %v1359 = vpop.f32.mrf.mxu0
    %v1360 = vadd.f32 %v669, %v1359
    %v1361 = vpop.f32.mrf.mxu0
    %1362 = vmatprep.mubr.bf16.mxu0 0
    %1363 = vmatmul.mubr.bf16.gmra.mxu0 %v1235
    %v1364 = vpop.f32.mrf.mxu0
    %v1365 = vadd.f32 %v670, %v1364
    %v1366 = vpop.f32.mrf.mxu0
    %v1367 = vpop.f32.mrf.mxu0
    %v1368 = vadd.f32 %v671, %v1367
    %v1369 = vpop.f32.mrf.mxu0
    %1370 = vmatprep.mubr.bf16.mxu0 0
    %1371 = vmatmul.mubr.bf16.gmra.mxu0 %v1236
    %v1372 = vpop.f32.mrf.mxu0
    %v1373 = vadd.f32 %v672, %v1372
    %v1374 = vpop.f32.mrf.mxu0
    %v1375 = vpop.f32.mrf.mxu0
    %v1376 = vadd.f32 %v673, %v1375
    %v1377 = vpop.f32.mrf.mxu0
    %1378 = vmatprep.mubr.bf16.mxu0 0
    %1379 = vmatmul.mubr.bf16.gmra.mxu0 %v1237
    %v1380 = vpop.f32.mrf.mxu0
    %v1381 = vadd.f32 %v674, %v1380
    %v1382 = vpop.f32.mrf.mxu0
    %v1383 = vpop.f32.mrf.mxu0
    %v1384 = vadd.f32 %v675, %v1383
    %v1385 = vpop.f32.mrf.mxu0
    %1386 = vmatprep.mubr.bf16.mxu0 0
    %1387 = vmatmul.mubr.bf16.gmra.mxu0 %v1238
    %v1388 = vpop.f32.mrf.mxu0
    %v1389 = vadd.f32 %v676, %v1388
    %v1390 = vpop.f32.mrf.mxu0
    %v1391 = vpop.f32.mrf.mxu0
    %v1392 = vadd.f32 %v677, %v1391
    %v1393 = vpop.f32.mrf.mxu0
    %1394 = vmatprep.mubr.bf16.mxu0 0
    %1395 = vmatmul.mubr.bf16.gmra.mxu0 %v1239
    %v1396 = vpop.f32.mrf.mxu0
    %v1397 = vadd.f32 %v678, %v1396
    %v1398 = vpop.f32.mrf.mxu0
    %v1399 = vpop.f32.mrf.mxu0
    %v1400 = vadd.f32 %v679, %v1399
    %v1401 = vpop.f32.mrf.mxu0
    %1402 = vmatprep.mubr.bf16.mxu0 0
    %1403 = vmatmul.mubr.bf16.gmra.mxu0 %v1240
    %v1404 = vpop.f32.mrf.mxu0
    %v1405 = vadd.f32 %v680, %v1404
    %v1406 = vpop.f32.mrf.mxu0
    %v1407 = vpop.f32.mrf.mxu0
    %v1408 = vadd.f32 %v681, %v1407
    %v1409 = vpop.f32.mrf.mxu0
    %1410 = vmatprep.mubr.bf16.mxu0 0
    %1411 = vmatmul.mubr.bf16.gmra.mxu0 %v1241
    %v1412 = vpop.f32.mrf.mxu0
    %v1413 = vadd.f32 %v682, %v1412
    %v1414 = vpop.f32.mrf.mxu0
    %v1415 = vpop.f32.mrf.mxu0
    %v1416 = vadd.f32 %v683, %v1415
    %v1417 = vpop.f32.mrf.mxu0
    %1418 = vdwg.mxu0
    %v1419 = vmax.f32 %v1357, %v1373
    %v1420 = vmax.f32 %v1360, %v1376
    %v1421 = vmax.f32 %v1365, %v1381
    %v1422 = vmax.f32 %v1368, %v1384
    %v1423 = vmax.f32 %v1419, %v1389
    %v1424 = vmax.f32 %v1420, %v1392
    %v1425 = vmax.f32 %v1421, %v1397
    %v1426 = vmax.f32 %v1422, %v1400
    %v1427 = vmax.f32 %v1423, %v1405
    %v1428 = vmax.f32 %v1424, %v1408
    %v1429 = vmax.f32 %v1425, %v1413
    %v1430 = vmax.f32 %v1426, %v1416
    %v1431 = vmax.f32 %v1427, %v1428
    %v1432 = vmax.f32 %v1429, %v1430
    %v1433 = vmax.f32 %v1431, %v1432
    %v1434 = vrot.slane %v1433, 4
    %v1435 = vmax.f32 %v1433, %v1434
    %v1436 = vrot.slane %v1435, 2
    %v1437 = vmax.f32 %v1435, %v1436
    %v1438 = vrot.slane %v1437, 1
    %v1439 = vmax.f32 %v1437, %v1438
    %v1440 = vsub.f32 %v1357, %v1439
    %v1441 = vsub.f32 %v1360, %v1439
    %v1442 = vsub.f32 %v1365, %v1439
    %v1443 = vsub.f32 %v1368, %v1439
    %v1444 = vsub.f32 %v1373, %v1439
    %v1445 = vsub.f32 %v1376, %v1439
    %v1446 = vsub.f32 %v1381, %v1439
    %v1447 = vsub.f32 %v1384, %v1439
    %v1448 = vsub.f32 %v1389, %v1439
    %v1449 = vsub.f32 %v1392, %v1439
    %v1450 = vsub.f32 %v1397, %v1439
    %v1451 = vsub.f32 %v1400, %v1439
    %v1452 = vsub.f32 %v1405, %v1439
    %v1453 = vsub.f32 %v1408, %v1439
    %v1454 = vsub.f32 %v1413, %v1439
    %v1455 = vsub.f32 %v1416, %v1439
    %v1456 = vmul.f32 %v1440, 1.442695
    %v1457 = vpow.pop %v1456
    %v1458 = vmul.f32 %v1441, 1.442695
    %v1459 = vpow.pop %v1458
    %v1460 = vmul.f32 %v1442, 1.442695
    %v1461 = vpow.pop %v1460
    %v1462 = vmul.f32 %v1443, 1.442695
    %v1463 = vpow.pop %v1462
    %v1464 = vmul.f32 %v1444, 1.442695
    %v1465 = vpow.pop %v1464
    %v1466 = vmul.f32 %v1445, 1.442695
    %v1467 = vpow.pop %v1466
    %v1468 = vmul.f32 %v1446, 1.442695
    %v1469 = vpow.pop %v1468
    %v1470 = vmul.f32 %v1447, 1.442695
    %v1471 = vpow.pop %v1470
    %v1472 = vmul.f32 %v1448, 1.442695
    %v1473 = vpow.pop %v1472
    %v1474 = vmul.f32 %v1449, 1.442695
    %v1475 = vpow.pop %v1474
    %v1476 = vmul.f32 %v1450, 1.442695
    %v1477 = vpow.pop %v1476
    %v1478 = vmul.f32 %v1451, 1.442695
    %v1479 = vpow.pop %v1478
    %v1480 = vmul.f32 %v1452, 1.442695
    %v1481 = vpow.pop %v1480
    %v1482 = vmul.f32 %v1453, 1.442695
    %v1483 = vpow.pop %v1482
    %v1484 = vmul.f32 %v1454, 1.442695
    %v1485 = vpow.pop %v1484
    %v1486 = vmul.f32 %v1455, 1.442695
    %v1487 = vpow.pop %v1486
    %v1488 = vadd.f32 %v1457, %v1459
    %v1489 = vadd.f32 %v1488, %v1461
    %v1490 = vadd.f32 %v1489, %v1463
    %v1491 = vadd.f32 %v1490, %v1465
    %v1492 = vadd.f32 %v1491, %v1467
    %v1493 = vadd.f32 %v1492, %v1469
    %v1494 = vadd.f32 %v1493, %v1471
    %v1495 = vadd.f32 %v1494, %v1473
    %v1496 = vadd.f32 %v1495, %v1475
    %v1497 = vadd.f32 %v1496, %v1477
    %v1498 = vadd.f32 %v1497, %v1479
    %v1499 = vadd.f32 %v1498, %v1481
    %v1500 = vadd.f32 %v1499, %v1483
    %v1501 = vadd.f32 %v1500, %v1485
    %v1502 = vadd.f32 %v1501, %v1487
    %v1503 = vrot.slane %v1502, 4
    %v1504 = vadd.f32 %v1502, %v1503
    %v1505 = vrot.slane %v1504, 2
    %v1506 = vadd.f32 %v1504, %v1505
    %v1507 = vrot.slane %v1506, 1
    %v1508 = vadd.f32 %v1506, %v1507
    %v1509 = vrcp.pop %v1508
    %v1510 = vmul.f32 %v1508, %v1509
    %v1511 = vsub.f32 2.0, %v1510
    %v1512 = vmul.f32 %v1509, %v1511
    %v1513 = vmul.f32 %v1457, %v1512
    %v1514 = vmul.f32 %v1459, %v1512
    %v1515 = vmul.f32 %v1461, %v1512
    %v1516 = vmul.f32 %v1463, %v1512
    %v1517 = vmul.f32 %v1465, %v1512
    %v1518 = vmul.f32 %v1467, %v1512
    %v1519 = vmul.f32 %v1469, %v1512
    %v1520 = vmul.f32 %v1471, %v1512
    %v1521 = vmul.f32 %v1473, %v1512
    %v1522 = vmul.f32 %v1475, %v1512
    %v1523 = vmul.f32 %v1477, %v1512
    %v1524 = vmul.f32 %v1479, %v1512
    %v1525 = vmul.f32 %v1481, %v1512
    %v1526 = vmul.f32 %v1483, %v1512
    %v1527 = vmul.f32 %v1485, %v1512
    %v1528 = vmul.f32 %v1487, %v1512
    %v1529 = vpack.c.bf16 %v1514, %v1513
    %v1530 = vpack.c.bf16 %v1516, %v1515
    %v1531 = vpack.c.bf16 %v1518, %v1517
    %v1532 = vpack.c.bf16 %v1520, %v1519
    %v1533 = vpack.c.bf16 %v1522, %v1521
    %v1534 = vpack.c.bf16 %v1524, %v1523
    %v1535 = vpack.c.bf16 %v1526, %v1525
    %v1536 = vpack.c.bf16 %v1528, %v1527
    %v1553 = vunpack.c.l.b16 %v1258
    %v1554 = vunpack.c.l.b16 %v1259
    %v1555 = vunpack.c.l.b16 %v1260
    %v1556 = vunpack.c.l.b16 %v1261
    %v1557 = vunpack.c.l.b16 %v1262
    %v1558 = vunpack.c.l.b16 %v1263
    %v1559 = vunpack.c.l.b16 %v1264
    %v1560 = vunpack.c.l.b16 %v1265
    %v1561 = vunpack.c.l.b16 %v1266
    %v1562 = vunpack.c.l.b16 %v1267
    %v1563 = vunpack.c.l.b16 %v1268
    %v1564 = vunpack.c.l.b16 %v1269
    %v1565 = vunpack.c.l.b16 %v1270
    %v1566 = vunpack.c.l.b16 %v1271
    %v1567 = vunpack.c.l.b16 %v1272
    %v1568 = vunpack.c.l.b16 %v1273
    %v1569 = vpack.c.b16 %v1554, %v1553
    %v1570 = vpack.c.b16 %v1556, %v1555
    %v1571 = vpack.c.b16 %v1558, %v1557
    %v1572 = vpack.c.b16 %v1560, %v1559
    %v1573 = vpack.c.b16 %v1562, %v1561
    %v1574 = vpack.c.b16 %v1564, %v1563
    %v1575 = vpack.c.b16 %v1566, %v1565
    %v1576 = vpack.c.b16 %v1568, %v1567
    %1585 = vmatprep.subr.bf16.mxu0 0
    %1586 = vmatpush1.bf16.msra.mxu0 %v1576
    %1587 = vmatprep.subr.bf16.mxu0 0
    %1588 = vmatpush1.bf16.msra.mxu0 %v1575
    %1589 = vmatprep.subr.bf16.mxu0 0
    %1590 = vmatpush1.bf16.msra.mxu0 %v1574
    %1591 = vmatprep.subr.bf16.mxu0 0
    %1592 = vmatpush1.bf16.msra.mxu0 %v1573
    %1593 = vmatprep.subr.bf16.mxu0 0
    %1594 = vmatpush1.bf16.msra.mxu0 %v1572
    %1595 = vmatprep.subr.bf16.mxu0 0
    %1596 = vmatpush1.bf16.msra.mxu0 %v1571
    %1597 = vmatprep.subr.bf16.mxu0 0
    %1598 = vmatpush1.bf16.msra.mxu0 %v1570
    %1599 = vmatprep.subr.bf16.mxu0 0
    %1600 = vmatpush1.bf16.msra.mxu0 %v1569
    %1601 = vmatprep.subr.bf16.mxu0 0
    %1602 = vmatpush2.bf16.msra.mxu0 0
    %1603 = vmatprep.subr.bf16.mxu0 0
    %1604 = vmatpush2.bf16.msra.mxu0 0
    %1605 = vmatprep.subr.bf16.mxu0 0
    %1606 = vmatpush2.bf16.msra.mxu0 0
    %1607 = vmatprep.subr.bf16.mxu0 0
    %1608 = vmatpush2.bf16.msra.mxu0 0
    %1609 = vmatprep.subr.bf16.mxu0 0
    %1610 = vmatpush2.bf16.msra.mxu0 0
    %1611 = vmatprep.subr.bf16.mxu0 0
    %1612 = vmatpush2.bf16.msra.mxu0 0
    %1613 = vmatprep.subr.bf16.mxu0 0
    %1614 = vmatpush2.bf16.msra.mxu0 0
    %1615 = vmatprep.subr.bf16.mxu0 0
    %1616 = vmatpush2.bf16.msra.mxu0 0
    %1617 = vmatprep.mubr.bf16.mxu0 0
    %1618 = vmatmul.mubr.bf16.gmra.mxu0 %v1529
    %v1619 = vpop.f32.mrf.mxu0
    %v1620 = vadd.f32 0.0, %v1619
    %v1621 = vpop.f32.mrf.mxu0
    %v1622 = vpop.f32.mrf.mxu0
    %v1623 = vadd.f32 0.0, %v1622
    %v1624 = vpop.f32.mrf.mxu0
    %1625 = vmatprep.mubr.bf16.mxu0 0
    %1626 = vmatmul.mubr.bf16.gmra.mxu0 %v1530
    %v1627 = vpop.f32.mrf.mxu0
    %v1628 = vadd.f32 0.0, %v1627
    %v1629 = vpop.f32.mrf.mxu0
    %v1630 = vpop.f32.mrf.mxu0
    %v1631 = vadd.f32 0.0, %v1630
    %v1632 = vpop.f32.mrf.mxu0
    %1633 = vmatprep.mubr.bf16.mxu0 0
    %1634 = vmatmul.mubr.bf16.gmra.mxu0 %v1531
    %v1635 = vpop.f32.mrf.mxu0
    %v1636 = vadd.f32 0.0, %v1635
    %v1637 = vpop.f32.mrf.mxu0
    %v1638 = vpop.f32.mrf.mxu0
    %v1639 = vadd.f32 0.0, %v1638
    %v1640 = vpop.f32.mrf.mxu0
    %1641 = vmatprep.mubr.bf16.mxu0 0
    %1642 = vmatmul.mubr.bf16.gmra.mxu0 %v1532
    %v1643 = vpop.f32.mrf.mxu0
    %v1644 = vadd.f32 0.0, %v1643
    %v1645 = vpop.f32.mrf.mxu0
    %v1646 = vpop.f32.mrf.mxu0
    %v1647 = vadd.f32 0.0, %v1646
    %v1648 = vpop.f32.mrf.mxu0
    %1649 = vmatprep.mubr.bf16.mxu0 0
    %1650 = vmatmul.mubr.bf16.gmra.mxu0 %v1533
    %v1651 = vpop.f32.mrf.mxu0
    %v1652 = vadd.f32 0.0, %v1651
    %v1653 = vpop.f32.mrf.mxu0
    %v1654 = vpop.f32.mrf.mxu0
    %v1655 = vadd.f32 0.0, %v1654
    %v1656 = vpop.f32.mrf.mxu0
    %1657 = vmatprep.mubr.bf16.mxu0 0
    %1658 = vmatmul.mubr.bf16.gmra.mxu0 %v1534
    %v1659 = vpop.f32.mrf.mxu0
    %v1660 = vadd.f32 0.0, %v1659
    %v1661 = vpop.f32.mrf.mxu0
    %v1662 = vpop.f32.mrf.mxu0
    %v1663 = vadd.f32 0.0, %v1662
    %v1664 = vpop.f32.mrf.mxu0
    %1665 = vmatprep.mubr.bf16.mxu0 0
    %1666 = vmatmul.mubr.bf16.gmra.mxu0 %v1535
    %v1667 = vpop.f32.mrf.mxu0
    %v1668 = vadd.f32 0.0, %v1667
    %v1669 = vpop.f32.mrf.mxu0
    %v1670 = vpop.f32.mrf.mxu0
    %v1671 = vadd.f32 0.0, %v1670
    %v1672 = vpop.f32.mrf.mxu0
    %1673 = vmatprep.mubr.bf16.mxu0 0
    %1674 = vmatmul.mubr.bf16.gmra.mxu0 %v1536
    %v1675 = vpop.f32.mrf.mxu0
    %v1676 = vadd.f32 0.0, %v1675
    %v1677 = vpop.f32.mrf.mxu0
    %v1678 = vpop.f32.mrf.mxu0
    %v1679 = vadd.f32 0.0, %v1678
    %v1680 = vpop.f32.mrf.mxu0
    %1681 = vdwg.mxu0
    %v1682 = vmul.f32 %v598, %v1620
    %v1683 = vmul.f32 %v598, %v1623
    %v1684 = vmul.f32 %v598, %v1628
    %v1685 = vmul.f32 %v598, %v1631
    %v1686 = vmul.f32 %v598, %v1636
    %v1687 = vmul.f32 %v598, %v1639
    %v1688 = vmul.f32 %v598, %v1644
    %v1689 = vmul.f32 %v598, %v1647
    %v1690 = vmul.f32 %v598, %v1652
    %v1691 = vmul.f32 %v598, %v1655
    %v1692 = vmul.f32 %v598, %v1660
    %v1693 = vmul.f32 %v598, %v1663
    %v1694 = vmul.f32 %v598, %v1668
    %v1695 = vmul.f32 %v598, %v1671
    %v1696 = vmul.f32 %v598, %v1676
    %v1697 = vmul.f32 %v598, %v1679
    %v1698 = vadd.f32 %v1218, %v1682
    %v1699 = vadd.f32 %v1219, %v1683
    %v1700 = vadd.f32 %v1220, %v1684
    %v1701 = vadd.f32 %v1221, %v1685
    %v1702 = vadd.f32 %v1222, %v1686
    %v1703 = vadd.f32 %v1223, %v1687
    %v1704 = vadd.f32 %v1224, %v1688
    %v1705 = vadd.f32 %v1225, %v1689
    %v1706 = vadd.f32 %v1226, %v1690
    %v1707 = vadd.f32 %v1227, %v1691
    %v1708 = vadd.f32 %v1228, %v1692
    %v1709 = vadd.f32 %v1229, %v1693
    %v1710 = vadd.f32 %v1230, %v1694
    %v1711 = vadd.f32 %v1231, %v1695
    %v1712 = vadd.f32 %v1232, %v1696
    %v1713 = vadd.f32 %v1233, %v1697
    %v1714 = vadd.f32 %v1698, %v1184
    %v1715 = vadd.f32 %v1699, %v1184
    %v1716 = vadd.f32 %v1700, %v1184
    %v1717 = vadd.f32 %v1701, %v1184
    %v1718 = vadd.f32 %v1702, %v1184
    %v1719 = vadd.f32 %v1703, %v1184
    %v1720 = vadd.f32 %v1704, %v1184
    %v1721 = vadd.f32 %v1705, %v1184
    %v1722 = vadd.f32 %v1706, %v1184
    %v1723 = vadd.f32 %v1707, %v1184
    %v1724 = vadd.f32 %v1708, %v1184
    %v1725 = vadd.f32 %v1709, %v1184
    %v1726 = vadd.f32 %v1710, %v1184
    %v1727 = vadd.f32 %v1711, %v1184
    %v1728 = vadd.f32 %v1712, %v1184
    %v1729 = vadd.f32 %v1713, %v1184
    %1730 = vst [vmem:[#allocation4 + $0x80] sm:$0xff] %v1714
    %1731 = vst [vmem:[#allocation4 + $0x88] sm:$0xff] %v1715
    %1732 = vst [vmem:[#allocation4 + $0x90] sm:$0xff] %v1716
    %1733 = vst [vmem:[#allocation4 + $0x98] sm:$0xff] %v1717
    %1734 = vst [vmem:[#allocation4 + $0xa0] sm:$0xff] %v1718
    %1735 = vst [vmem:[#allocation4 + $0xa8] sm:$0xff] %v1719
    %1736 = vst [vmem:[#allocation4 + $0xb0] sm:$0xff] %v1720
    %1737 = vst [vmem:[#allocation4 + $0xb8] sm:$0xff] %v1721
    %1738 = vst [vmem:[#allocation4 + $0xc0] sm:$0xff] %v1722
    %1739 = vst [vmem:[#allocation4 + $0xc8] sm:$0xff] %v1723
    %1740 = vst [vmem:[#allocation4 + $0xd0] sm:$0xff] %v1724
    %1741 = vst [vmem:[#allocation4 + $0xd8] sm:$0xff] %v1725
    %1742 = vst [vmem:[#allocation4 + $0xe0] sm:$0xff] %v1726
    %1743 = vst [vmem:[#allocation4 + $0xe8] sm:$0xff] %v1727
    %1744 = vst [vmem:[#allocation4 + $0xf0] sm:$0xff] %v1728
    %1745 = vst [vmem:[#allocation4 + $0xf8] sm:$0xff] %v1729
    // Predicated region
    $region22: #{self_attention_forward.1} parent=1 // pred_check
      _
    $region23: #{self_attention_forward.1} parent=1 // pred_check_branch
      %1747 = sbr.rel (0) target = $region25
    $region24: #{self_attention_forward.1} parent=1 // pred_region
      %s1749 = ssub.s32 4096, 4096
      %1750 = vsyncadd [#allocation5], %s1749
      %s1751 = sshll.u32 [#allocation4], 4
      %s1752 = int_to_ptr.vmem [resolvable:$true] %s1751
      %1757 = dma.vmem_to_hbm [thread:$0]  %s1752, 4096, %s5, [#allocation5], 128, 128, 8
    $region25: #{self_attention_forward.1} parent=1 // pred_fallthru
      _
    // Predicated region
    $region26: #{self_attention_forward.1} parent=1 // pred_check
      _
    $region27: #{self_attention_forward.1} parent=1 // pred_check_branch
      %1759 = sbr.rel (0) target = $region29
    $region28: #{self_attention_forward.1} parent=1 // pred_region
      %1760 = dma.done [#allocation5], 4096
    $region29: #{self_attention_forward.1} parent=1 // pred_fallthru
      _
    %1761 = vsyncpa [#allocation5], 1

</llo_original>
